<compile_context>
chip_gen: v7x
topology: tpu7x:2x2x1
jax: 0.10.0
libtpu: 0.0.40
codegen_flags: <defaults>
</compile_context>

<pallas_src>
import functools

import jax
import jax.numpy as jnp
from jax.experimental import pallas as pl
from jax.experimental.pallas import tpu as pltpu

K = 4                  # every DCGAN deconv uses a 4x4 kernel
BN_EPS = 1e-5
LRELU_SLOPE = 0.01     # torch.nn.LeakyReLU default negative_slope
LANE = 128             # TPU lane width


def _round_up(x, m):
    return (x + m - 1) // m * m


# ----------------------------------------------------------------------------
# Generation-aware VMEM budgeting
# ----------------------------------------------------------------------------
@functools.lru_cache(maxsize=1)
def _vmem_capacity_bytes():
    try:
        return int(pltpu.get_tpu_info().vmem_capacity_bytes)
    except Exception:
        return 64 << 20            # conservative fallback: v7x (64 MiB / TC)


def _tile_budget():
    cap = _vmem_capacity_bytes()
    # ~1/3 of physical VMEM for the double-buffered working set:
    #   v7x (64 MiB) -> ~21 MiB,  v5e/v6e (128 MiB) -> ~42 MiB.
    return int(min(max(cap // 3, 16 << 20), 56 << 20))


def _clamp_vmem_limit(need):
    cap = _vmem_capacity_bytes()
    # <= 40 MiB on 64 MiB parts, <= 80 MiB on 128 MiB parts.
    return int(min(max(need + (4 << 20), 16 << 20), cap * 5 // 8))


# ----------------------------------------------------------------------------
# Pallas kernels (the hot path)
# ----------------------------------------------------------------------------
def _mm_stats_kernel(p_ref, w_ref, o_ref, sum_ref, sq_ref):
    """(TM, Kd) @ (Kd, OCp) on the MXU (f32 accumulate).  Pre-activations are
    stored in o_ref's dtype (bf16 fast path); per-channel sum / sum-of-squares
    are taken from the f32 accumulator and carried across the M grid axis so
    BatchNorm batch statistics stay exact under tiling and bf16 storage."""
    m = pl.program_id(1)
    x = jnp.dot(p_ref[...], w_ref[...], preferred_element_type=jnp.float32)
    o_ref[...] = x.astype(o_ref.dtype)
    s = jnp.sum(x, axis=0, keepdims=True)
    q = jnp.sum(x * x, axis=0, keepdims=True)

    @pl.when(m == 0)
    def _():
        sum_ref[...] = s
        sq_ref[...] = q

    @pl.when(m != 0)
    def _():
        sum_ref[...] = sum_ref[...] + s
        sq_ref[...] = sq_ref[...] + q


def _mm_stats_single_kernel(z_ref, w_ref, o_ref, sum_ref, sq_ref):
    """Block 0: single-M-block matmul + per-column stats (no carry needed)."""
    x = jnp.dot(z_ref[...], w_ref[...], preferred_element_type=jnp.float32)
    o_ref[...] = x.astype(o_ref.dtype)
    sum_ref[...] = jnp.sum(x, axis=0, keepdims=True)
    sq_ref[...] = jnp.sum(x * x, axis=0, keepdims=True)


def _mmT_bias_tanh_kernel(w_ref, p_ref, b_ref, o_ref):
    """Output block, transposed GEMM: (OCp8, Kd) @ (Kd, TMl) + bias + tanh.
    OC (=3, padded to 8) sits on sublanes; M sits on lanes (lane-dense)."""
    x = jnp.dot(w_ref[...], p_ref[...], preferred_element_type=jnp.float32)
    o_ref[...] = jnp.tanh(x + b_ref[...])


# ----------------------------------------------------------------------------
# Pallas-call runners
# ----------------------------------------------------------------------------
def _run_block0(z, w0, use_bf16):
    """Block 0: ConvT(IC, C0, 4, 1, 0) as ONE matmul (Np, IC) @ (IC, 16*C0p),
    tiled over output columns.  Returns pre (Np, 16*C0p) [bf16/f32],
    psum / psq (1, 16*C0p) f32, and C0p."""
    N, IC = z.shape
    C0 = w0.shape[1]
    C0p = _round_up(C0, 8)          # keeps 16*C0p a multiple of 128 (lane-dense)
    cols = 16 * C0p
    cdt = jnp.bfloat16 if use_bf16 else jnp.float32
    isz = 2 if use_bf16 else 4
    Np = _round_up(N, 8)

    # weight (IC, C0, 4, 4) -> (IC, kh, kw, C0p) -> (IC, 16*C0p)
    wm = w0.transpose(0, 2, 3, 1)
    if C0p != C0:
        wm = jnp.pad(wm, ((0, 0), (0, 0), (0, 0), (0, C0p - C0)))
    wm = wm.reshape(IC, cols).astype(cdt)
    zp = z if Np == N else jnp.pad(z, ((0, Np - N), (0, 0)))
    zp = zp.astype(cdt)

    budget = _tile_budget()
    TC = LANE
    t = LANE
    while t <= cols:
        if cols % t == 0:
            need = (2 * IC * t * isz + 2 * Np * t * isz
                    + 4 * t * 4 + 2 * Np * IC * isz)
            if need <= budget:
                TC = t
        t *= 2
    ct = cols // TC
    need = 2 * IC * TC * isz + 2 * Np * TC * isz + 4 * TC * 4 + 2 * Np * IC * isz

    pre, psum, psq = pl.pallas_call(
        _mm_stats_single_kernel,
        out_shape=(jax.ShapeDtypeStruct((Np, cols), cdt),
                   jax.ShapeDtypeStruct((1, cols), jnp.float32),
                   jax.ShapeDtypeStruct((1, cols), jnp.float32)),
        grid=(ct,),
        in_specs=[
            pl.BlockSpec((Np, IC), lambda c: (0, 0)),
            pl.BlockSpec((IC, TC), lambda c: (0, c)),
        ],
        out_specs=(
            pl.BlockSpec((Np, TC), lambda c: (0, c)),
            pl.BlockSpec((1, TC), lambda c: (0, c)),
            pl.BlockSpec((1, TC), lambda c: (0, c)),
        ),
        compiler_params=pltpu.CompilerParams(
            dimension_semantics=("parallel",),
            vmem_limit_bytes=_clamp_vmem_limit(need)),
        cost_estimate=pl.CostEstimate(
            flops=2 * Np * IC * cols,
            transcendentals=0,
            bytes_accessed=(Np * IC * isz + IC * cols * isz
                            + Np * cols * isz + 2 * cols * 4)),
    )(zp, wm)
    return pre, psum, psq, C0p


def _choose_tm(M, Kd, OCp, isz):
    budget = _tile_budget()
    tm = 2048
    while tm > 8:
        need = (2 * tm * Kd * isz + 2 * Kd * OCp * isz
                + 2 * tm * OCp * isz + 4 * OCp * 4)
        if need <= budget:
            break
        tm //= 2
    tm = max(8, min(tm, _round_up(M, 8)))
    while M % tm and tm > 8:      # prefer a TM that divides M (no pad copy)
        tm //= 2
    return tm


def _run_hidden_matmul(patches, wmats, use_bf16):
    """Per-phase matmul + exact per-channel batch statistics.
    patches: (P, M, Kd) in compute dtype;  wmats: (P, Kd, OC) f32.
    Returns pre (P, Mp, OCp) compute dtype, psum / psq (P, 1, OCp) f32."""
    P, M, Kd = patches.shape
    OC = wmats.shape[2]
    OCp = _round_up(OC, LANE)
    cdt = jnp.bfloat16 if use_bf16 else jnp.float32
    isz = 2 if use_bf16 else 4
    TM = _choose_tm(M, Kd, OCp, isz)
    Mp = _round_up(M, TM)
    pat = patches.astype(cdt)
    if Mp != M:
        pat = jnp.pad(pat, ((0, 0), (0, Mp - M), (0, 0)))
    wm = wmats
    if OCp != OC:
        wm = jnp.pad(wm, ((0, 0), (0, 0), (0, OCp - OC)))
    wm = wm.astype(cdt)
    mt = Mp // TM
    need = (2 * TM * Kd * isz + 2 * Kd * OCp * isz
            + 2 * TM * OCp * isz + 4 * OCp * 4)

    pre, psum, psq = pl.pallas_call(
        _mm_stats_kernel,
        out_shape=(jax.ShapeDtypeStruct((P, Mp, OCp), cdt),
                   jax.ShapeDtypeStruct((P, 1, OCp), jnp.float32),
                   jax.ShapeDtypeStruct((P, 1, OCp), jnp.float32)),
        grid=(P, mt),
        in_specs=[
            pl.BlockSpec((pl.Squeezed(), TM, Kd), lambda p, i: (p, i, 0)),
            pl.BlockSpec((pl.Squeezed(), Kd, OCp), lambda p, i: (p, 0, 0)),
        ],
        out_specs=(
            pl.BlockSpec((pl.Squeezed(), TM, OCp), lambda p, i: (p, i, 0)),
            pl.BlockSpec((pl.Squeezed(), 1, OCp), lambda p, i: (p, 0, 0)),
            pl.BlockSpec((pl.Squeezed(), 1, OCp), lambda p, i: (p, 0, 0)),
        ),
        compiler_params=pltpu.CompilerParams(
            dimension_semantics=("parallel", "arbitrary"),
            vmem_limit_bytes=_clamp_vmem_limit(need)),
        cost_estimate=pl.CostEstimate(
            flops=2 * P * Mp * Kd * OCp,
            transcendentals=0,
            bytes_accessed=(P * Mp * Kd * isz + P * Kd * OCp * isz
                            + P * Mp * OCp * isz + 4 * P * OCp * 4)),
    )(pat, wm)
    return pre, psum, psq


def _run_out_block(patT, wT, bias, use_bf16):
    """Output block (transposed GEMM): per phase (OCp8, Kd) @ (Kd, M) + bias +
    tanh.  patT: (P, Kd, M) compute dtype; wT: (P, OC, Kd) f32; bias: (OC,).
    Returns (P, OC, M) float32."""
    P, Kd, M = patT.shape
    OC = wT.shape[1]
    OCp = _round_up(OC, 8)
    cdt = jnp.bfloat16 if use_bf16 else jnp.float32
    isz = 2 if use_bf16 else 4
    budget = _tile_budget()
    TMl = 4096
    while TMl > 128:
        need = (2 * Kd * TMl * isz + 2 * OCp * TMl * 4
                + 2 * OCp * Kd * isz + OCp * 4)
        if need <= budget:
            break
        TMl //= 2
    TMl = min(TMl, _round_up(M, 128))
    while M % TMl and TMl > 128:
        TMl //= 2
    Mp = _round_up(M, TMl)
    need = (2 * Kd * TMl * isz + 2 * OCp * TMl * 4
            + 2 * OCp * Kd * isz + OCp * 4)

    pat = patT.astype(cdt)
    if Mp != M:
        pat = jnp.pad(pat, ((0, 0), (0, 0), (0, Mp - M)))
    w = wT
    if OCp != OC:
        w = jnp.pad(w, ((0, 0), (0, OCp - OC), (0, 0)))
    w = w.astype(cdt)
    b = jnp.pad(bias.astype(jnp.float32), (0, OCp - OC)).reshape(OCp, 1)
    mt = Mp // TMl

    out = pl.pallas_call(
        _mmT_bias_tanh_kernel,
        out_shape=jax.ShapeDtypeStruct((P, OCp, Mp), jnp.float32),
        grid=(P, mt),
        in_specs=[
            pl.BlockSpec((pl.Squeezed(), OCp, Kd), lambda p, i: (p, 0, 0)),
            pl.BlockSpec((pl.Squeezed(), Kd, TMl), lambda p, i: (p, 0, i)),
            pl.BlockSpec((OCp, 1), lambda p, i: (0, 0)),
        ],
        out_specs=pl.BlockSpec((pl.Squeezed(), OCp, TMl), lambda p, i: (p, 0, i)),
        compiler_params=pltpu.CompilerParams(
            dimension_semantics=("parallel", "parallel"),
            vmem_limit_bytes=_clamp_vmem_limit(need)),
        cost_estimate=pl.CostEstimate(
            flops=2 * P * OCp * Kd * Mp,
            transcendentals=P * OCp * Mp,
            bytes_accessed=(P * Kd * Mp * isz + P * OCp * Kd * isz
                            + P * OCp * Mp * 4)),
    )(w, pat, b)
    return out[:, :OC, :M]


# ----------------------------------------------------------------------------
# XLA glue: BN fold / lazy BN-apply + LeakyReLU (fuses into the next layer's
# patch construction), phase-decomposed ConvTranspose2d data movement.
# ----------------------------------------------------------------------------
# Per output-row parity a: taps (input row shift dh, kernel row kh) so that
# output row oh = 2*m + a receives x[m + dh] * w[kh]  (oh = 2*ih - 1 + kh).
_S2_TAPS = ([(0, 1), (-1, 3)],   # a == 0 (even output rows)
            [(1, 0), (0, 2)])    # a == 1 (odd output rows)


def _bn_fold(psum, psq, gamma, beta, count):
    mean = psum / count
    var = jnp.maximum(psq / count - mean * mean, 0.0)
    scale = gamma.astype(jnp.float32) * jax.lax.rsqrt(var + BN_EPS)
    shift = beta.astype(jnp.float32) - mean * scale
    return scale, shift


def _bn_lrelu(pre, scale, shift):
    """Lazy BN-apply + LeakyReLU (per-channel, channels-last); XLA fuses this
    into the downstream pad / gather / concat that builds the next patches."""
    y = pre.astype(jnp.float32) * scale + shift
    return jnp.where(y >= 0, y, LRELU_SLOPE * y)


def _phase_patches_stride2(x, w, dtype):
    """Sub-pixel decomposition of ConvTranspose2d(k=4, s=2, p=1), no structural
    zeros.  x: (N, H, W, IC) channels-last post-activation values (lazy);
    w: (IC, OC, 4, 4).  Returns patches (4, N*H*W, 4*IC) in `dtype` and
    weights (4, 4*IC, OC) f32; phase p = a*2+b -> output pixels (2m+a, 2l+b)."""
    N, H, W, IC = x.shape
    xp = jnp.pad(x, ((0, 0), (1, 1), (1, 1), (0, 0)))
    pats, wms = [], []
    for a in range(2):
        for b in range(2):
            taps, rows = [], []
            for dh, kh in _S2_TAPS[a]:
                for dw, kw in _S2_TAPS[b]:
                    taps.append(xp[:, 1 + dh:1 + dh + H, 1 + dw:1 + dw + W, :])
                    rows.append(w[:, :, kh, kw])                     # (IC, OC)
            pats.append(jnp.concatenate(taps, axis=-1)
                        .reshape(N * H * W, 4 * IC).astype(dtype))
            wms.append(jnp.concatenate(rows, axis=0))                # (4*IC, OC)
    return jnp.stack(pats, axis=0), jnp.stack(wms, axis=0)


def _phase_patches_stride2_T(x, w, dtype):
    """Transposed variant for the output block: patches (4, 4*IC, N*H*W),
    weights (4, OC, 4*IC)."""
    N, H, W, IC = x.shape
    xp = jnp.pad(x, ((0, 0), (1, 1), (1, 1), (0, 0)))
    pats, wms = [], []
    for a in range(2):
        for b in range(2):
            taps, cols = [], []
            for dh, kh in _S2_TAPS[a]:
                for dw, kw in _S2_TAPS[b]:
                    t = xp[:, 1 + dh:1 + dh + H, 1 + dw:1 + dw + W, :]
                    taps.append(t.transpose(3, 0, 1, 2).reshape(IC, N * H * W))
                    cols.append(w[:, :, kh, kw].T)                   # (OC, IC)
            pats.append(jnp.concatenate(taps, axis=0).astype(dtype))  # (4IC, M)
            wms.append(jnp.concatenate(cols, axis=1))                 # (OC, 4IC)
    return jnp.stack(pats, axis=0), jnp.stack(wms, axis=0)


def _interleave_stride2(y, N, H, W, OC):
    """(4, N*H*W, OC) phase outputs -> (N, 2H, 2W, OC)."""
    y = y.reshape(2, 2, N, H, W, OC)                    # [a, b, n, m, l, oc]
    return y.transpose(2, 3, 0, 4, 1, 5).reshape(N, 2 * H, 2 * W, OC)


# ----------------------------------------------------------------------------
# Parameter construction (mirrors DCGANGenerator.__init__)
#   params[0]    : {'w','gamma','beta'}  ConvT(IC, C, 4, 1, 0) + BN + LeakyReLU
#   params[1:-1] : {'w','gamma','beta'}  ConvT(C, C//2, 4, 2, 1) + BN + LeakyReLU
#   params[-1]   : {'w','bias'}          ConvT(C, OC, 4, 2, 1) + Tanh
# ----------------------------------------------------------------------------
def init_dcgan_generator_params(key, in_channels, out_channels=3, image_size=64,
                                min_hidden_channels=128):
    if not isinstance(image_size, int):
        raise TypeError('image_size must be an int.')
    if image_size <= 4 or image_size & (image_size - 1) != 0:
        raise ValueError('image_size must be a power of 2 greater than 4')
    nblocks = 1
    sz = image_size
    while sz > 4:
        nblocks += 1
        sz //= 2
    assert sz == 4 and nblocks >= 2
    C = min_hidden_channels * 2 ** (nblocks - 2)

    keys = jax.random.split(key, 3 * nblocks)
    ki = iter(range(3 * nblocks))
    params = []

    w = 0.02 * jax.random.normal(keys[next(ki)], (in_channels, C, K, K), jnp.float32)
    g = 1.0 + 0.1 * jax.random.normal(keys[next(ki)], (C,), jnp.float32)
    b = 0.1 * jax.random.normal(keys[next(ki)], (C,), jnp.float32)
    params.append(dict(w=w, gamma=g, beta=b))

    for _ in range(nblocks - 2):
        w = 0.02 * jax.random.normal(keys[next(ki)], (C, C // 2, K, K), jnp.float32)
        g = 1.0 + 0.1 * jax.random.normal(keys[next(ki)], (C // 2,), jnp.float32)
        b = 0.1 * jax.random.normal(keys[next(ki)], (C // 2,), jnp.float32)
        params.append(dict(w=w, gamma=g, beta=b))
        C //= 2
    assert C == min_hidden_channels

    w = 0.02 * jax.random.normal(keys[next(ki)], (C, out_channels, K, K), jnp.float32)
    bias = 0.1 * jax.random.normal(keys[next(ki)], (out_channels,), jnp.float32)
    params.append(dict(w=w, bias=bias))
    return params


# ----------------------------------------------------------------------------
# Forward pass (Pallas)
# ----------------------------------------------------------------------------
@functools.partial(jax.jit, static_argnames=("use_bf16",))
def dcgan_generator_forward(params, Z, use_bf16=True):
    """Z: (N, IC) or (N, IC, 1, 1)  ->  (N, OC, S, S) NCHW float32 (like PyTorch)."""
    if Z.ndim == 4:
        Z = Z[:, :, 0, 0]
    z = Z.astype(jnp.float32)
    N = z.shape[0]
    cdt = jnp.bfloat16 if use_bf16 else jnp.float32

    # block 0: ConvT(IC, C0, 4, 1, 0, bias=False) as one matmul + stats.
    p0 = params[0]
    C0 = p0['w'].shape[1]
    pre0, psum0, psq0, C0p = _run_block0(z, p0['w'], use_bf16)
    s = psum0[0].reshape(16, C0p)[:, :C0].sum(axis=0)
    q = psq0[0].reshape(16, C0p)[:, :C0].sum(axis=0)
    scale, shift = _bn_fold(s, q, p0['gamma'], p0['beta'], N * K * K)
    x_pre = pre0[:N].reshape(N, K, K, C0p)[..., :C0]           # (N, 4, 4, C0)
    x = _bn_lrelu(x_pre, scale, shift)     # lazy; fuses into next patch build

    # middle blocks: ConvT(C, C//2, 4, 2, 1, bias=False) + deferred BN + LReLU
    for p in params[1:-1]:
        Nb, H, W, _ = x.shape
        OC = p['w'].shape[1]
        pat, wm = _phase_patches_stride2(x, p['w'], cdt)
        pre, psum, psq = _run_hidden_matmul(pat, wm, use_bf16)
        s = jnp.sum(psum[:, 0, :OC], axis=0)
        q = jnp.sum(psq[:, 0, :OC], axis=0)
        scale, shift = _bn_fold(s, q, p['gamma'], p['beta'], 4 * Nb * H * W)
        y = pre[:, :Nb * H * W, :OC]
        x_pre = _interleave_stride2(y, Nb, H, W, OC)           # (N, 2H, 2W, OC)
        x = _bn_lrelu(x_pre, scale, shift)

    # output block: ConvT(C, OC, 4, 2, 1, bias=True) + Tanh (transposed GEMM).
    p = params[-1]
    Nb, H, W, _ = x.shape
    OC = p['w'].shape[1]
    patT, wT = _phase_patches_stride2_T(x, p['w'], cdt)
    y = _run_out_block(patT, wT, p['bias'], use_bf16)          # (4, OC, N*H*W)
    out = (y.reshape(2, 2, OC, Nb, H, W)
            .transpose(3, 2, 4, 0, 5, 1)
            .reshape(Nb, OC, 2 * H, 2 * W))                    # NCHW
    return out


# ----------------------------------------------------------------------------
# Pure-JAX reference (for the correctness check)
# ----------------------------------------------------------------------------
def _ref_forward(params, Z):
    if Z.ndim == 2:
        Z = Z[:, :, None, None]
    x = Z.astype(jnp.float32)
    for li, p in enumerate(params):
        w = p['w']
        stride, pad = (1, 0) if li == 0 else (2, 1)
        wc = jnp.flip(w, axis=(2, 3)).transpose(1, 0, 2, 3)   # (OC, IC, K, K)
        pc = K - 1 - pad
        x = jax.lax.conv_general_dilated(
            x, wc, window_strides=(1, 1), padding=[(pc, pc), (pc, pc)],
            lhs_dilation=(stride, stride),
            dimension_numbers=('NCHW', 'OIHW', 'NCHW'),
            precision=jax.lax.Precision.HIGHEST)
        if li < len(params) - 1:
            mean = x.mean(axis=(0, 2, 3), keepdims=True)
            var = jnp.square(x - mean).mean(axis=(0, 2, 3), keepdims=True)
            xn = (x - mean) * jax.lax.rsqrt(var + BN_EPS)
            y = xn * p['gamma'][None, :, None, None] + p['beta'][None, :, None, None]
            x = jnp.where(y >= 0, y, LRELU_SLOPE * y)
        else:
            x = jnp.tanh(x + p['bias'][None, :, None, None])
    return x


if __name__ == "__main__":
    key = jax.random.PRNGKey(0)
    kp, kz = jax.random.split(key)

    # small shapes: latent=16, out=3 channels, 16x16 image, min hidden=16, batch=2
    in_channels, out_channels, image_size, min_hidden = 16, 3, 16, 16
    params = init_dcgan_generator_params(kp, in_channels, out_channels,
                                         image_size, min_hidden)
    Z = jax.random.normal(kz, (2, in_channels), jnp.float32)

    # fast path: bf16 MXU inputs / bf16 intermediates, f32 accumulation & stats
    out = jax.block_until_ready(dcgan_generator_forward(params, Z))
    assert out.shape == (2, out_channels, image_size, image_size), out.shape

    ref = _ref_forward(params, Z)

    # exact-math path (all-f32) must match the reference tightly
    out_f32 = jax.block_until_ready(
        dcgan_generator_forward(params, Z, use_bf16=False))
    err_f32 = float(jnp.max(jnp.abs(out_f32 - ref)))
    assert err_f32 < 5e-3, f"f32-path mismatch vs reference: {err_f32}"

    # bf16 fast path: bounded rounding error only
    err_bf16 = float(jnp.max(jnp.abs(out - ref)))
    assert err_bf16 < 1.5e-1, f"bf16-path mismatch vs reference: {err_bf16}"

    print("KERNEL_OK")
</pallas_src>

<mosaic_0001>
module attributes {stable_mosaic.version = 11 : i64} {
  func.func @_mm_stats_single_kernel(%arg0: i32, %arg1: memref<8x16xbf16, #tpu.memory_space<vmem>>, %arg2: memref<16x512xbf16, #tpu.memory_space<vmem>>, %arg3: memref<8x512xbf16, #tpu.memory_space<vmem>>, %arg4: memref<1x512xf32, #tpu.memory_space<vmem>>, %arg5: memref<1x512xf32, #tpu.memory_space<vmem>>) attributes {dimension_semantics = [#tpu.dimension_semantics<parallel>], iteration_bounds = array<i64: 1>, scalar_prefetch = 0 : i64, scratch_operands = 0 : i64, tpu.core_type = #tpu.core_type<tc>, window_params = [{pipeline_mode = #tpu.pipeline_mode<synchronous>, transform_indices = @transform_0, window_bounds = array<i64: 8, 16>}, {transform_indices = @transform_1, window_bounds = array<i64: 16, 512>}, {transform_indices = @transform_2, window_bounds = array<i64: 8, 512>}, {transform_indices = @transform_3, window_bounds = array<i64: 1, 512>}, {transform_indices = @transform_4, window_bounds = array<i64: 1, 512>}]} {
    %c0 = arith.constant 0 : index
    %c0_0 = arith.constant 0 : index
    %0 = vector.load %arg1[%c0, %c0_0] : memref<8x16xbf16, #tpu.memory_space<vmem>>, vector<8x16xbf16>
    %c0_1 = arith.constant 0 : index
    %c0_2 = arith.constant 0 : index
    %1 = vector.load %arg2[%c0_1, %c0_2] : memref<16x512xbf16, #tpu.memory_space<vmem>>, vector<16x512xbf16>
    %cst = arith.constant dense<0.000000e+00> : vector<8x512xf32>
    %2 = tpu.matmul %0, %1, %cst {dimension_numbers = #tpu.dot_dimension_numbers<[1], [0], [0], [1], [0, 0, 1, 1], [], []>} : vector<8x16xbf16>, vector<16x512xbf16>, vector<8x512xf32> -> vector<8x512xf32>
    %3 = arith.truncf %2 : vector<8x512xf32> to vector<8x512xbf16>
    %c0_3 = arith.constant 0 : index
    %c0_4 = arith.constant 0 : index
    %4 = vector.load %arg3[%c0_3, %c0_4] : memref<8x512xbf16, #tpu.memory_space<vmem>>, vector<8x512xbf16>
    tpu.vector_store %arg3[%c0_3, %c0_4], %3 {strides = array<i32>} : memref<8x512xbf16, #tpu.memory_space<vmem>>, vector<8x512xbf16>,
    %cst_5 = arith.constant dense<0.000000e+00> : vector<512xf32>
    %5 = vector.multi_reduction <add>, %2, %cst_5 [0] : vector<8x512xf32> to vector<512xf32>
    %6 = vector.shape_cast %5 : vector<512xf32> to vector<1x512xf32>
    %c0_6 = arith.constant 0 : index
    %c0_7 = arith.constant 0 : index
    %7 = vector.load %arg4[%c0_6, %c0_7] : memref<1x512xf32, #tpu.memory_space<vmem>>, vector<1x512xf32>
    tpu.vector_store %arg4[%c0_6, %c0_7], %6 {strides = array<i32>} : memref<1x512xf32, #tpu.memory_space<vmem>>, vector<1x512xf32>,
    %8 = arith.mulf %2, %2 : vector<8x512xf32>
    %cst_8 = arith.constant dense<0.000000e+00> : vector<512xf32>
    %9 = vector.multi_reduction <add>, %8, %cst_8 [0] : vector<8x512xf32> to vector<512xf32>
    %10 = vector.shape_cast %9 : vector<512xf32> to vector<1x512xf32>
    %c0_9 = arith.constant 0 : index
    %c0_10 = arith.constant 0 : index
    %11 = vector.load %arg5[%c0_9, %c0_10] : memref<1x512xf32, #tpu.memory_space<vmem>>, vector<1x512xf32>
    tpu.vector_store %arg5[%c0_9, %c0_10], %10 {strides = array<i32>} : memref<1x512xf32, #tpu.memory_space<vmem>>, vector<1x512xf32>,
    return
  }
  func.func @transform_0(%arg0: i32) -> (i32, i32) {
    %c0_i32 = arith.constant 0 : i32
    %c0_i32_0 = arith.constant 0 : i32
    %c0_i32_1 = arith.constant 0 : i32
    return %c0_i32, %c0_i32_0 : i32, i32
  }
  func.func @transform_1(%arg0: i32) -> (i32, i32) {
    %c0_i32 = arith.constant 0 : i32
    %c0_i32_0 = arith.constant 0 : i32
    return %c0_i32, %arg0 : i32, i32
  }
  func.func @transform_2(%arg0: i32) -> (i32, i32) {
    %c0_i32 = arith.constant 0 : i32
    %c0_i32_0 = arith.constant 0 : i32
    return %c0_i32, %arg0 : i32, i32
  }
  func.func @transform_3(%arg0: i32) -> (i32, i32) {
    %c0_i32 = arith.constant 0 : i32
    %c0_i32_0 = arith.constant 0 : i32
    return %c0_i32, %arg0 : i32, i32
  }
  func.func @transform_4(%arg0: i32) -> (i32, i32) {
    %c0_i32 = arith.constant 0 : i32
    %c0_i32_0 = arith.constant 0 : i32
    return %c0_i32, %arg0 : i32, i32
  }
}

module attributes {stable_mosaic.version = 11 : i64} {
  func.func @_mm_stats_kernel(%arg0: i32, %arg1: i32, %arg2: memref<1x32x128xbf16, #tpu.memory_space<vmem>>, %arg3: memref<1x128x128xbf16, #tpu.memory_space<vmem>>, %arg4: memref<1x32x128xbf16, #tpu.memory_space<vmem>>, %arg5: memref<1x1x128xf32, #tpu.memory_space<vmem>>, %arg6: memref<1x1x128xf32, #tpu.memory_space<vmem>>) attributes {dimension_semantics = [#tpu.dimension_semantics<parallel>, #tpu.dimension_semantics<arbitrary>], iteration_bounds = array<i64: 4, 1>, scalar_prefetch = 0 : i64, scratch_operands = 0 : i64, tpu.core_type = #tpu.core_type<tc>, window_params = [{transform_indices = @transform_0, window_bounds = array<i64: 1, 32, 128>}, {transform_indices = @transform_1, window_bounds = array<i64: 1, 128, 128>}, {transform_indices = @transform_2, window_bounds = array<i64: 1, 32, 128>}, {transform_indices = @transform_3, window_bounds = array<i64: 1, 1, 128>}, {transform_indices = @transform_4, window_bounds = array<i64: 1, 1, 128>}]} {
    %c0 = arith.constant 0 : index
    %c0_0 = arith.constant 0 : index
    %c0_1 = arith.constant 0 : index
    %0 = vector.load %arg2[%c0, %c0_0, %c0_1] : memref<1x32x128xbf16, #tpu.memory_space<vmem>>, vector<1x32x128xbf16>
    %1 = vector.shape_cast %0 : vector<1x32x128xbf16> to vector<32x128xbf16>
    %c0_2 = arith.constant 0 : index
    %c0_3 = arith.constant 0 : index
    %c0_4 = arith.constant 0 : index
    %2 = vector.load %arg3[%c0_2, %c0_3, %c0_4] : memref<1x128x128xbf16, #tpu.memory_space<vmem>>, vector<1x128x128xbf16>
    %3 = vector.shape_cast %2 : vector<1x128x128xbf16> to vector<128x128xbf16>
    %cst = arith.constant dense<0.000000e+00> : vector<32x128xf32>
    %4 = tpu.matmul %1, %3, %cst {dimension_numbers = #tpu.dot_dimension_numbers<[1], [0], [0], [1], [0, 0, 1, 1], [], []>} : vector<32x128xbf16>, vector<128x128xbf16>, vector<32x128xf32> -> vector<32x128xf32>
    %5 = arith.truncf %4 : vector<32x128xf32> to vector<32x128xbf16>
    %c0_5 = arith.constant 0 : index
    %c0_6 = arith.constant 0 : index
    %c0_7 = arith.constant 0 : index
    %6 = vector.load %arg4[%c0_5, %c0_6, %c0_7] : memref<1x32x128xbf16, #tpu.memory_space<vmem>>, vector<1x32x128xbf16>
    %7 = vector.shape_cast %6 : vector<1x32x128xbf16> to vector<32x128xbf16>
    %8 = vector.shape_cast %5 : vector<32x128xbf16> to vector<1x32x128xbf16>
    tpu.vector_store %arg4[%c0_5, %c0_6, %c0_7], %8 {strides = array<i32>} : memref<1x32x128xbf16, #tpu.memory_space<vmem>>, vector<1x32x128xbf16>,
    %cst_8 = arith.constant dense<0.000000e+00> : vector<128xf32>
    %9 = vector.multi_reduction <add>, %4, %cst_8 [0] : vector<32x128xf32> to vector<128xf32>
    %10 = vector.shape_cast %9 : vector<128xf32> to vector<1x128xf32>
    %11 = arith.mulf %4, %4 : vector<32x128xf32>
    %cst_9 = arith.constant dense<0.000000e+00> : vector<128xf32>
    %12 = vector.multi_reduction <add>, %11, %cst_9 [0] : vector<32x128xf32> to vector<128xf32>
    %13 = vector.shape_cast %12 : vector<128xf32> to vector<1x128xf32>
    %c0_i32 = arith.constant 0 : i32
    %14 = arith.cmpi eq, %arg1, %c0_i32 : i32
    %15 = arith.extui %14 : i1 to i32
    %c0_i32_10 = arith.constant 0 : i32
    %16 = arith.cmpi ne, %15, %c0_i32_10 : i32
    scf.if %16 {
      %c0_13 = arith.constant 0 : index
      %c0_14 = arith.constant 0 : index
      %c0_15 = arith.constant 0 : index
      %20 = vector.load %arg5[%c0_13, %c0_14, %c0_15] : memref<1x1x128xf32, #tpu.memory_space<vmem>>, vector<1x1x128xf32>
      %21 = vector.shape_cast %20 : vector<1x1x128xf32> to vector<1x128xf32>
      %22 = vector.shape_cast %10 : vector<1x128xf32> to vector<1x1x128xf32>
      tpu.vector_store %arg5[%c0_13, %c0_14, %c0_15], %22 {strides = array<i32>} : memref<1x1x128xf32, #tpu.memory_space<vmem>>, vector<1x1x128xf32>,
      %c0_16 = arith.constant 0 : index
      %c0_17 = arith.constant 0 : index
      %c0_18 = arith.constant 0 : index
      %23 = vector.load %arg6[%c0_16, %c0_17, %c0_18] : memref<1x1x128xf32, #tpu.memory_space<vmem>>, vector<1x1x128xf32>
      %24 = vector.shape_cast %23 : vector<1x1x128xf32> to vector<1x128xf32>
      %25 = vector.shape_cast %13 : vector<1x128xf32> to vector<1x1x128xf32>
      tpu.vector_store %arg6[%c0_16, %c0_17, %c0_18], %25 {strides = array<i32>} : memref<1x1x128xf32, #tpu.memory_space<vmem>>, vector<1x1x128xf32>,
    } else {
    }
    %c0_i32_11 = arith.constant 0 : i32
    %17 = arith.cmpi ne, %arg1, %c0_i32_11 : i32
    %18 = arith.extui %17 : i1 to i32
    %c0_i32_12 = arith.constant 0 : i32
    %19 = arith.cmpi ne, %18, %c0_i32_12 : i32
    scf.if %19 {
      %c0_13 = arith.constant 0 : index
      %c0_14 = arith.constant 0 : index
      %c0_15 = arith.constant 0 : index
      %20 = vector.load %arg5[%c0_13, %c0_14, %c0_15] : memref<1x1x128xf32, #tpu.memory_space<vmem>>, vector<1x1x128xf32>
      %21 = vector.shape_cast %20 : vector<1x1x128xf32> to vector<1x128xf32>
      %22 = arith.addf %21, %10 : vector<1x128xf32>
      %c0_16 = arith.constant 0 : index
      %c0_17 = arith.constant 0 : index
      %c0_18 = arith.constant 0 : index
      %23 = vector.load %arg5[%c0_16, %c0_17, %c0_18] : memref<1x1x128xf32, #tpu.memory_space<vmem>>, vector<1x1x128xf32>
      %24 = vector.shape_cast %23 : vector<1x1x128xf32> to vector<1x128xf32>
      %25 = vector.shape_cast %22 : vector<1x128xf32> to vector<1x1x128xf32>
      tpu.vector_store %arg5[%c0_16, %c0_17, %c0_18], %25 {strides = array<i32>} : memref<1x1x128xf32, #tpu.memory_space<vmem>>, vector<1x1x128xf32>,
      %c0_19 = arith.constant 0 : index
      %c0_20 = arith.constant 0 : index
      %c0_21 = arith.constant 0 : index
      %26 = vector.load %arg6[%c0_19, %c0_20, %c0_21] : memref<1x1x128xf32, #tpu.memory_space<vmem>>, vector<1x1x128xf32>
      %27 = vector.shape_cast %26 : vector<1x1x128xf32> to vector<1x128xf32>
      %28 = arith.addf %27, %13 : vector<1x128xf32>
      %c0_22 = arith.constant 0 : index
      %c0_23 = arith.constant 0 : index
      %c0_24 = arith.constant 0 : index
      %29 = vector.load %arg6[%c0_22, %c0_23, %c0_24] : memref<1x1x128xf32, #tpu.memory_space<vmem>>, vector<1x1x128xf32>
      %30 = vector.shape_cast %29 : vector<1x1x128xf32> to vector<1x128xf32>
      %31 = vector.shape_cast %28 : vector<1x128xf32> to vector<1x1x128xf32>
      tpu.vector_store %arg6[%c0_22, %c0_23, %c0_24], %31 {strides = array<i32>} : memref<1x1x128xf32, #tpu.memory_space<vmem>>, vector<1x1x128xf32>,
    } else {
    }
    return
  }
  func.func @transform_0(%arg0: i32, %arg1: i32) -> (i32, i32, i32) {
    %c0_i32 = arith.constant 0 : i32
    %c0_i32_0 = arith.constant 0 : i32
    return %arg0, %arg1, %c0_i32 : i32, i32, i32
  }
  func.func @transform_1(%arg0: i32, %arg1: i32) -> (i32, i32, i32) {
    %c0_i32 = arith.constant 0 : i32
    %c0_i32_0 = arith.constant 0 : i32
    %c0_i32_1 = arith.constant 0 : i32
    return %arg0, %c0_i32, %c0_i32_0 : i32, i32, i32
  }
  func.func @transform_2(%arg0: i32, %arg1: i32) -> (i32, i32, i32) {
    %c0_i32 = arith.constant 0 : i32
    %c0_i32_0 = arith.constant 0 : i32
    return %arg0, %arg1, %c0_i32 : i32, i32, i32
  }
  func.func @transform_3(%arg0: i32, %arg1: i32) -> (i32, i32, i32) {
    %c0_i32 = arith.constant 0 : i32
    %c0_i32_0 = arith.constant 0 : i32
    %c0_i32_1 = arith.constant 0 : i32
    return %arg0, %c0_i32, %c0_i32_0 : i32, i32, i32
  }
  func.func @transform_4(%arg0: i32, %arg1: i32) -> (i32, i32, i32) {
    %c0_i32 = arith.constant 0 : i32
    %c0_i32_0 = arith.constant 0 : i32
    %c0_i32_1 = arith.constant 0 : i32
    return %arg0, %c0_i32, %c0_i32_0 : i32, i32, i32
  }
}

module attributes {stable_mosaic.version = 11 : i64} {
  func.func @_mmT_bias_tanh_kernel(%arg0: i32, %arg1: i32, %arg2: memref<1x8x64xbf16, #tpu.memory_space<vmem>>, %arg3: memref<1x64x128xbf16, #tpu.memory_space<vmem>>, %arg4: memref<8x1xf32, #tpu.memory_space<vmem>>, %arg5: memref<1x8x128xf32, #tpu.memory_space<vmem>>) attributes {dimension_semantics = [#tpu.dimension_semantics<parallel>, #tpu.dimension_semantics<parallel>], iteration_bounds = array<i64: 4, 1>, scalar_prefetch = 0 : i64, scratch_operands = 0 : i64, tpu.core_type = #tpu.core_type<tc>, window_params = [{transform_indices = @transform_0, window_bounds = array<i64: 1, 8, 64>}, {transform_indices = @transform_1, window_bounds = array<i64: 1, 64, 128>}, {pipeline_mode = #tpu.pipeline_mode<synchronous>, transform_indices = @transform_2, window_bounds = array<i64: 8, 1>}, {transform_indices = @transform_3, window_bounds = array<i64: 1, 8, 128>}]} {
    %c0 = arith.constant 0 : index
    %c0_0 = arith.constant 0 : index
    %c0_1 = arith.constant 0 : index
    %0 = vector.load %arg2[%c0, %c0_0, %c0_1] : memref<1x8x64xbf16, #tpu.memory_space<vmem>>, vector<1x8x64xbf16>
    %1 = vector.shape_cast %0 : vector<1x8x64xbf16> to vector<8x64xbf16>
    %c0_2 = arith.constant 0 : index
    %c0_3 = arith.constant 0 : index
    %c0_4 = arith.constant 0 : index
    %2 = vector.load %arg3[%c0_2, %c0_3, %c0_4] : memref<1x64x128xbf16, #tpu.memory_space<vmem>>, vector<1x64x128xbf16>
    %3 = vector.shape_cast %2 : vector<1x64x128xbf16> to vector<64x128xbf16>
    %cst = arith.constant dense<0.000000e+00> : vector<8x128xf32>
    %4 = tpu.matmul %1, %3, %cst {dimension_numbers = #tpu.dot_dimension_numbers<[1], [0], [0], [1], [0, 0, 1, 1], [], []>} : vector<8x64xbf16>, vector<64x128xbf16>, vector<8x128xf32> -> vector<8x128xf32>
    %c0_5 = arith.constant 0 : index
    %c0_6 = arith.constant 0 : index
    %5 = vector.load %arg4[%c0_5, %c0_6] : memref<8x1xf32, #tpu.memory_space<vmem>>, vector<8x1xf32>
    %6 = vector.broadcast %5 : vector<8x1xf32> to vector<8x128xf32>
    %7 = arith.addf %4, %6 : vector<8x128xf32>
    %8 = math.tanh %7 : vector<8x128xf32>
    %c0_7 = arith.constant 0 : index
    %c0_8 = arith.constant 0 : index
    %c0_9 = arith.constant 0 : index
    %9 = vector.load %arg5[%c0_7, %c0_8, %c0_9] : memref<1x8x128xf32, #tpu.memory_space<vmem>>, vector<1x8x128xf32>
    %10 = vector.shape_cast %9 : vector<1x8x128xf32> to vector<8x128xf32>
    %11 = vector.shape_cast %8 : vector<8x128xf32> to vector<1x8x128xf32>
    tpu.vector_store %arg5[%c0_7, %c0_8, %c0_9], %11 {strides = array<i32>} : memref<1x8x128xf32, #tpu.memory_space<vmem>>, vector<1x8x128xf32>,
    return
  }
  func.func @transform_0(%arg0: i32, %arg1: i32) -> (i32, i32, i32) {
    %c0_i32 = arith.constant 0 : i32
    %c0_i32_0 = arith.constant 0 : i32
    %c0_i32_1 = arith.constant 0 : i32
    return %arg0, %c0_i32, %c0_i32_0 : i32, i32, i32
  }
  func.func @transform_1(%arg0: i32, %arg1: i32) -> (i32, i32, i32) {
    %c0_i32 = arith.constant 0 : i32
    %c0_i32_0 = arith.constant 0 : i32
    return %arg0, %c0_i32, %arg1 : i32, i32, i32
  }
  func.func @transform_2(%arg0: i32, %arg1: i32) -> (i32, i32) {
    %c0_i32 = arith.constant 0 : i32
    %c0_i32_0 = arith.constant 0 : i32
    %c0_i32_1 = arith.constant 0 : i32
    return %c0_i32, %c0_i32_0 : i32, i32
  }
  func.func @transform_3(%arg0: i32, %arg1: i32) -> (i32, i32, i32) {
    %c0_i32 = arith.constant 0 : i32
    %c0_i32_0 = arith.constant 0 : i32
    return %arg0, %c0_i32, %arg1 : i32, i32, i32
  }
}

</mosaic_0001>

<llo_original>
// kernel: squeeze.36
$region0: #{squeeze.36}
  %s0 = inlined_call_operand.vmem [shape: f32[512], index: 0, kind: input, shape index: {}]
  %s1 = inlined_call_operand.vmem [shape: f32[16,32], index: 1, kind: output, shape index: {}]
  $region1: #{squeeze.36} parent=0
    #allocation0 [shape = 'u8[4096]{0}', space=vmem, size = 0x1000, scoped, tag = 'scoped mem for input reshape']
    %s3 = sshllo.u32 0, 4
    %v4 = vld [vmem:[%s0] sm:%s3]
    %5 = vst [vmem:[#allocation0] sm:%s3] %v4
    %v6 = vld [vmem:[#allocation0] sm:$0xf]
    %vm7 = vcmask 261120
    %8 = vst.msk [vmem:[%s1] ss:$4 sm:$0xf] %vm7, %v6
    %v9 = vld [vmem:[#allocation0] sm:$0xf]
    %10 = vrot.lane.b32.xlu0 %v9, 96
    %v11 = vpop.permute.xlu0 %10
    %vm12 = vcmask 261120
    %s13 = scalar_lea.vmem %s1, 1
    %14 = vst.msk [vmem:[%s13] ss:$4 sm:$0xf] %vm12, %v11
    %v15 = vld [vmem:[#allocation0] sm:$0xf]
    %16 = vrot.lane.b32.xlu0 %v15, 64
    %v17 = vpop.permute.xlu0 %16
    %vm18 = vcmask 261120
    %s19 = scalar_lea.vmem %s1, 2
    %20 = vst.msk [vmem:[%s19] ss:$4 sm:$0xf] %vm18, %v17
    %v21 = vld [vmem:[#allocation0] sm:$0xf]
    %22 = vrot.lane.b32.xlu0 %v21, 32
    %v23 = vpop.permute.xlu0 %22
    %vm24 = vcmask 261120
    %s25 = scalar_lea.vmem %s1, 3
    %26 = vst.msk [vmem:[%s25] ss:$4 sm:$0xf] %vm24, %v23

// kernel: dcgan_generator_forward.3
$region0: #{dcgan_generator_forward.3}
  #allocation0 [shape = 'u32[]', space=smem, size = 0x4, offset = 0x4, fixed_abs, tag = 'smem constant byte address 0x4 - core index']
  #allocation1 [shape = 'u32[144,128]{1,0:T(1,128)}', space=vmem, size = 0x12000, scoped, tag = 'internal scratch']
  %s0 = inlined_call_operand.vmem [shape: bf16[8,16], index: 0, kind: input, shape index: {}]
  %s1 = inlined_call_operand.vmem [shape: bf16[16,512], index: 1, kind: input, shape index: {}]
  %s2 = inlined_call_operand.vmem [shape: bf16[8,512], index: 2, kind: output, shape index: {0}]
  %s3 = inlined_call_operand.vmem [shape: f32[1,512], index: 3, kind: output, shape index: {1}]
  %s4 = inlined_call_operand.vmem [shape: f32[1,512], index: 4, kind: output, shape index: {2}]
  %5 = xla_tuple %s2, %s3, %s4
  %s6 = sld [smem:[#allocation0]]
  $region34: #{dcgan_generator_forward.3} parent=0
    _
  %s8 = ssub.s32 1, %s6
  %s9 = scalar_select 0, %s8, %s6
  // Predicated region
  $region2: #{dcgan_generator_forward.3} parent=0 // pred_check
    _
  $region3: #{dcgan_generator_forward.3} parent=0 // pred_check_branch
    %11 = sbr.rel (0) target = $region5
  $region4: #{dcgan_generator_forward.3} parent=0 // pred_region
    _
  $region5: #{dcgan_generator_forward.3} parent=0 // pred_fallthru
    _
  // Predicated region
  $region6: #{dcgan_generator_forward.3} parent=0 // pred_check
    _
  $region7: #{dcgan_generator_forward.3} parent=0 // pred_check_branch
    %13 = sbr.rel (0) target = $region9
  $region8: #{dcgan_generator_forward.3} parent=0 // pred_region
    _
  $region9: #{dcgan_generator_forward.3} parent=0 // pred_fallthru
    _
  %v15 = vld [vmem:[%s0] sm:$0xf]
  %v16 = vld [vmem:[%s1] sm:$0xff]
  %v17 = vld [vmem:[%s1 + $0x8] sm:$0xff]
  %v18 = vld [vmem:[%s1 + $0x10] sm:$0xff]
  %v19 = vld [vmem:[%s1 + $0x18] sm:$0xff]
  %v24 = vunpack.c.l.b16 %v16
  %v25 = vunpack.c.h.b16 %v16
  %v26 = vunpack.c.l.b16 %v17
  %v27 = vunpack.c.h.b16 %v17
  %v28 = vunpack.c.l.b16 %v18
  %v29 = vunpack.c.h.b16 %v18
  %v30 = vunpack.c.l.b16 %v19
  %v31 = vunpack.c.h.b16 %v19
  %v32 = vpack.c.b16 %v28, %v24
  %v33 = vpack.c.b16 %v29, %v25
  %v34 = vpack.c.b16 %v30, %v26
  %v35 = vpack.c.b16 %v31, %v27
  %vm40 = vcmask 130048
  %v42 = vsel %vm40, %v15, 0
  %44 = vmatprep.subr.bf16.mxu0 %v33
  %45 = vmatpush1.bf16.msra.mxu0 %v32
  %46 = vmatprep.subr.bf16.mxu0 0
  %47 = vmatpush1.bf16.msra.mxu0 0
  %48 = vmatprep.subr.bf16.mxu0 0
  %49 = vmatpush1.bf16.msra.mxu0 0
  %50 = vmatprep.subr.bf16.mxu0 0
  %51 = vmatpush1.bf16.msra.mxu0 0
  %52 = vmatprep.subr.bf16.mxu0 0
  %53 = vmatpush1.bf16.msra.mxu0 0
  %54 = vmatprep.subr.bf16.mxu0 0
  %55 = vmatpush1.bf16.msra.mxu0 0
  %56 = vmatprep.subr.bf16.mxu0 0
  %57 = vmatpush1.bf16.msra.mxu0 0
  %58 = vmatprep.subr.bf16.mxu0 0
  %59 = vmatpush1.bf16.msra.mxu0 0
  %60 = vmatprep.subr.bf16.mxu0 0
  %61 = vmatpush1.bf16.msra.mxu0 0
  %62 = vmatprep.subr.bf16.mxu0 0
  %63 = vmatpush1.bf16.msra.mxu0 0
  %64 = vmatprep.subr.bf16.mxu0 0
  %65 = vmatpush1.bf16.msra.mxu0 0
  %66 = vmatprep.subr.bf16.mxu0 0
  %67 = vmatpush1.bf16.msra.mxu0 0
  %68 = vmatprep.subr.bf16.mxu0 0
  %69 = vmatpush1.bf16.msra.mxu0 0
  %70 = vmatprep.subr.bf16.mxu0 0
  %71 = vmatpush1.bf16.msra.mxu0 0
  %72 = vmatprep.subr.bf16.mxu0 0
  %73 = vmatpush1.bf16.msra.mxu0 0
  %74 = vmatprep.subr.bf16.mxu0 0
  %75 = vmatpush1.bf16.msra.mxu0 0
  %76 = vmatprep.mubr.bf16.mxu0 0
  %77 = vmatmul.mubr.bf16.gmra.mrb[0].mxu0 %v42
  %v78 = vpop.f32.mrb[0].mxu0
  %v79 = vadd.f32 0.0, %v78
  %v80 = vpop.f32.mrb[0].mxu0
  %v81 = vadd.f32 0.0, %v80
  %v82 = vpop.f32.mrb[0].mxu0
  %v83 = vpop.f32.mrb[0].mxu0
  %84 = vdwg.mxu0
  %85 = vmatprep.subr.bf16.mxu0 %v35
  %86 = vmatpush1.bf16.msra.mxu0 %v34
  %87 = vmatprep.subr.bf16.mxu0 0
  %88 = vmatpush1.bf16.msra.mxu0 0
  %89 = vmatprep.subr.bf16.mxu0 0
  %90 = vmatpush1.bf16.msra.mxu0 0
  %91 = vmatprep.subr.bf16.mxu0 0
  %92 = vmatpush1.bf16.msra.mxu0 0
  %93 = vmatprep.subr.bf16.mxu0 0
  %94 = vmatpush1.bf16.msra.mxu0 0
  %95 = vmatprep.subr.bf16.mxu0 0
  %96 = vmatpush1.bf16.msra.mxu0 0
  %97 = vmatprep.subr.bf16.mxu0 0
  %98 = vmatpush1.bf16.msra.mxu0 0
  %99 = vmatprep.subr.bf16.mxu0 0
  %100 = vmatpush1.bf16.msra.mxu0 0
  %101 = vmatprep.subr.bf16.mxu0 0
  %102 = vmatpush1.bf16.msra.mxu0 0
  %103 = vmatprep.subr.bf16.mxu0 0
  %104 = vmatpush1.bf16.msra.mxu0 0
  %105 = vmatprep.subr.bf16.mxu0 0
  %106 = vmatpush1.bf16.msra.mxu0 0
  %107 = vmatprep.subr.bf16.mxu0 0
  %108 = vmatpush1.bf16.msra.mxu0 0
  %109 = vmatprep.subr.bf16.mxu0 0
  %110 = vmatpush1.bf16.msra.mxu0 0
  %111 = vmatprep.subr.bf16.mxu0 0
  %112 = vmatpush1.bf16.msra.mxu0 0
  %113 = vmatprep.subr.bf16.mxu0 0
  %114 = vmatpush1.bf16.msra.mxu0 0
  %115 = vmatprep.subr.bf16.mxu0 0
  %116 = vmatpush1.bf16.msra.mxu0 0
  %117 = vmatprep.mubr.bf16.mxu0 0
  %118 = vmatmul.mubr.bf16.gmra.mrb[0].mxu0 %v42
  %v119 = vpop.f32.mrb[0].mxu0
  %v120 = vadd.f32 0.0, %v119
  %v121 = vpop.f32.mrb[0].mxu0
  %v122 = vadd.f32 0.0, %v121
  %v123 = vpop.f32.mrb[0].mxu0
  %v124 = vpop.f32.mrb[0].mxu0
  %125 = vdwg.mxu0
  %v126 = vpack.c.bf16 %v79, %v79
  %v127 = vpack.c.bf16 %v81, %v81
  %v128 = vpack.c.bf16 %v120, %v120
  %v129 = vpack.c.bf16 %v122, %v122
  %v134 = vunpack.c.l.b16 %v126
  %v135 = vunpack.c.l.b16 %v127
  %v136 = vunpack.c.l.b16 %v128
  %v137 = vunpack.c.l.b16 %v129
  %v138 = vpack.c.b16 %v135, %v134
  %v139 = vpack.c.b16 %v137, %v136
  %142 = vst [vmem:[%s2] sm:$0xff] %v138
  %143 = vst [vmem:[%s2 + $0x8] sm:$0xff] %v139
  %v144 = vrot.slane %v79, 4
  %v145 = vadd.f32 %v79, %v144
  %v146 = vrot.slane %v145, 2
  %v147 = vadd.f32 %v145, %v146
  %v148 = vrot.slane %v147, 1
  %v149 = vadd.f32 %v147, %v148
  %v150 = vrot.slane %v81, 4
  %v151 = vadd.f32 %v81, %v150
  %v152 = vrot.slane %v151, 2
  %v153 = vadd.f32 %v151, %v152
  %v154 = vrot.slane %v153, 1
  %v155 = vadd.f32 %v153, %v154
  %v156 = vrot.slane %v120, 4
  %v157 = vadd.f32 %v120, %v156
  %v158 = vrot.slane %v157, 2
  %v159 = vadd.f32 %v157, %v158
  %v160 = vrot.slane %v159, 1
  %v161 = vadd.f32 %v159, %v160
  %v162 = vrot.slane %v122, 4
  %v163 = vadd.f32 %v122, %v162
  %v164 = vrot.slane %v163, 2
  %v165 = vadd.f32 %v163, %v164
  %v166 = vrot.slane %v165, 1
  %v167 = vadd.f32 %v165, %v166
  %v172 = vcombine.low %v149, %v155
  %v173 = vcombine.low %v161, %v167
  %v175 = vunpack.c.l.s4 1966171168
  %v176 = vunpack.c.0.s8 %v175
  %v177 = vlaneseq
  %v178 = vshrl.u32 %v177, 7
  %v179 = vsub.s32 %v176, %v178
  %v180 = vrot.slane %v172, %v179
  %v182 = vunpack.c.l.s4 1966171168
  %v183 = vunpack.c.0.s8 %v182
  %v184 = vlaneseq
  %v185 = vshrl.u32 %v184, 7
  %v186 = vsub.s32 %v183, %v185
  %v187 = vrot.slane %v173, %v186
  %v188 = vcombine.low %v180, %v187
  %v190 = vunpack.c.l.s4 1966171168
  %v191 = vunpack.c.0.s8 %v190
  %v192 = vlaneseq
  %v193 = vshrl.u32 %v192, 7
  %v194 = vsub.s32 %v191, %v193
  %v195 = vrot.slane %v188, %v194
  %v197 = vlaneseq
  %vm198 = vcmp.ge.s32.totalorder %v197, 0
  %vm199 = vcmp.lt.s32.totalorder %v197, 512
  %vm200 = vmand %vm198, %vm199
  %201 = vst.msk [vmem:[%s3] sm:$0xf] %vm200, %v195
  %v202 = vmul.f32 %v79, %v79
  %v203 = vmul.f32 %v81, %v81
  %v204 = vmul.f32 %v120, %v120
  %v205 = vmul.f32 %v122, %v122
  %v206 = vrot.slane %v202, 4
  %v207 = vadd.f32 %v202, %v206
  %v208 = vrot.slane %v207, 2
  %v209 = vadd.f32 %v207, %v208
  %v210 = vrot.slane %v209, 1
  %v211 = vadd.f32 %v209, %v210
  %v212 = vrot.slane %v203, 4
  %v213 = vadd.f32 %v203, %v212
  %v214 = vrot.slane %v213, 2
  %v215 = vadd.f32 %v213, %v214
  %v216 = vrot.slane %v215, 1
  %v217 = vadd.f32 %v215, %v216
  %v218 = vrot.slane %v204, 4
  %v219 = vadd.f32 %v204, %v218
  %v220 = vrot.slane %v219, 2
  %v221 = vadd.f32 %v219, %v220
  %v222 = vrot.slane %v221, 1
  %v223 = vadd.f32 %v221, %v222
  %v224 = vrot.slane %v205, 4
  %v225 = vadd.f32 %v205, %v224
  %v226 = vrot.slane %v225, 2
  %v227 = vadd.f32 %v225, %v226
  %v228 = vrot.slane %v227, 1
  %v229 = vadd.f32 %v227, %v228
  %v234 = vcombine.low %v211, %v217
  %v235 = vcombine.low %v223, %v229
  %v237 = vunpack.c.l.s4 1966171168
  %v238 = vunpack.c.0.s8 %v237
  %v239 = vlaneseq
  %v240 = vshrl.u32 %v239, 7
  %v241 = vsub.s32 %v238, %v240
  %v242 = vrot.slane %v234, %v241
  %v244 = vunpack.c.l.s4 1966171168
  %v245 = vunpack.c.0.s8 %v244
  %v246 = vlaneseq
  %v247 = vshrl.u32 %v246, 7
  %v248 = vsub.s32 %v245, %v247
  %v249 = vrot.slane %v235, %v248
  %v250 = vcombine.low %v242, %v249
  %v252 = vunpack.c.l.s4 1966171168
  %v253 = vunpack.c.0.s8 %v252
  %v254 = vlaneseq
  %v255 = vshrl.u32 %v254, 7
  %v256 = vsub.s32 %v253, %v255
  %v257 = vrot.slane %v250, %v256
  %259 = vst.msk [vmem:[%s4] sm:$0xf] %vm200, %v257
  // Predicated region
  $region10: #{dcgan_generator_forward.3} parent=0 // pred_check
    _
  $region11: #{dcgan_generator_forward.3} parent=0 // pred_check_branch
    %261 = sbr.rel (0) target = $region13
  $region12: #{dcgan_generator_forward.3} parent=0 // pred_region
    _
  $region13: #{dcgan_generator_forward.3} parent=0 // pred_fallthru
    _
  // Predicated region
  $region14: #{dcgan_generator_forward.3} parent=0 // pred_check
    _
  $region15: #{dcgan_generator_forward.3} parent=0 // pred_check_branch
    %263 = sbr.rel (0) target = $region17
  $region16: #{dcgan_generator_forward.3} parent=0 // pred_region
    _
  $region17: #{dcgan_generator_forward.3} parent=0 // pred_fallthru
    _
  // Predicated region
  $region18: #{dcgan_generator_forward.3} parent=0 // pred_check
    _
  $region19: #{dcgan_generator_forward.3} parent=0 // pred_check_branch
    %265 = sbr.rel (0) target = $region21
  $region20: #{dcgan_generator_forward.3} parent=0 // pred_region
    _
  $region21: #{dcgan_generator_forward.3} parent=0 // pred_fallthru
    _
  // Predicated region
  $region22: #{dcgan_generator_forward.3} parent=0 // pred_check
    _
  $region23: #{dcgan_generator_forward.3} parent=0 // pred_check_branch
    %267 = sbr.rel (0) target = $region25
  $region24: #{dcgan_generator_forward.3} parent=0 // pred_region
    _
  $region25: #{dcgan_generator_forward.3} parent=0 // pred_fallthru
    _
  // Predicated region
  $region26: #{dcgan_generator_forward.3} parent=0 // pred_check
    _
  $region27: #{dcgan_generator_forward.3} parent=0 // pred_check_branch
    %269 = sbr.rel (0) target = $region29
  $region28: #{dcgan_generator_forward.3} parent=0 // pred_region
    _
  $region29: #{dcgan_generator_forward.3} parent=0 // pred_fallthru
    _
  // Predicated region
  $region30: #{dcgan_generator_forward.3} parent=0 // pred_check
    _
  $region31: #{dcgan_generator_forward.3} parent=0 // pred_check_branch
    %271 = sbr.rel (0) target = $region33
  $region32: #{dcgan_generator_forward.3} parent=0 // pred_region
    _
  $region33: #{dcgan_generator_forward.3} parent=0 // pred_fallthru
    _

// kernel: dcgan_generator_forward.4
$region0: #{dcgan_generator_forward.4}
  #allocation0 [shape = 'u32[]', space=smem, size = 0x4, offset = 0x4, fixed_abs, tag = 'smem constant byte address 0x4 - core index']
  #allocation1 [shape = 'u32[144,128]{1,0:T(1,128)}', space=vmem, size = 0x12000, scoped, tag = 'internal scratch']
  %s0 = inlined_call_operand.vmem [shape: bf16[4,32,128], index: 0, kind: input, shape index: {}]
  %s1 = inlined_call_operand.vmem [shape: bf16[4,128,128], index: 1, kind: input, shape index: {}]
  %s2 = inlined_call_operand.vmem [shape: bf16[4,32,128], index: 2, kind: output, shape index: {0}]
  %s3 = inlined_call_operand.vmem [shape: f32[4,1,128], index: 3, kind: output, shape index: {1}]
  %s4 = inlined_call_operand.vmem [shape: f32[4,1,128], index: 4, kind: output, shape index: {2}]
  %5 = xla_tuple %s2, %s3, %s4
  %s6 = sld [smem:[#allocation0]]
  $region65: #{dcgan_generator_forward.4} parent=0
    _
  %s8 = ssub.s32 1, %s6
  %s9 = scalar_select 0, %s8, %s6
  loop: start=0, step=1, limit=6
  $region2: #{dcgan_generator_forward.4} parent=0 // loop_pre_header
    _
  $region3: #{dcgan_generator_forward.4} parent=0 // loop_header
    %s11 = sphi 0, %s15
    %p12 = scmp.ge.s32.totalorder %s11, 6
    %s18 = sphi 0, %s30
    %s19 = sphi 0, %s26
    %s20 = sphi 0, %s18
    %s21 = sphi 0, %s19
    %s22 = sphi 0, %s20
    %s23 = sphi 0, %s21
    %s35 = sphi 0, %s37
    %s38 = sphi 0, %s35
    %s39 = sphi 0, %s38
    %s55 = sphi 0, %s39
    %s61 = sphi 0, %s63
    %s64 = sphi 0, %s61
    %s65 = sphi 0, %s64
    %s81 = sphi 0, %s65
    %s89 = sphi 0, %s91
    %s92 = sphi 0, %s89
    %s93 = sphi 0, %s92
    %s109 = sphi 0, %s93
    %s115 = sphi 0, %s117
    %s118 = sphi 0, %s115
    %s119 = sphi 0, %s118
    %s135 = sphi 0, %s119
    %s141 = sphi 0, %s143
    %s144 = sphi 0, %s141
    %s145 = sphi 0, %s144
    %s161 = sphi 0, %s145
  $region4: #{dcgan_generator_forward.4} parent=0 // loop_header_branch
    %14 = sbr.rel (%p12) target = $region8
  $region5: #{dcgan_generator_forward.4} parent=0 // loop_body
    %s16 = ssub.s32 %s11, 1
    %s17 = ssub.s32 %s11, 2
    %s24 = sadd.s32 1, %s19
    %p25 = scmp.ge.s32.totalorder %s24, 1
    %s26 = scalar_select %p25, 0, %s24
    %s27 = sadd.s32 1, %s18
    %s28 = scalar_select %p25, %s27, %s18
    %p29 = scmp.ge.s32.totalorder %s28, 4
    %s30 = scalar_select %p29, 0, %s28
    %s31 = ssub.s32 %s18, %s30
    %s32 = ssub.s32 %s19, %s26
    %s33 = sor.u32 %s31, %s32
    %p34 = scmp.eq.s32.totalorder %s33, 0
    %s36 = sadd.s32 %s35, 1
    %s37 = scalar_select %p34, %s35, %s36
    %p40 = pneg %p34
    %p41 = scmp.eq.s32.totalorder %s11, 3
    %p42 = por %p40, %p41
    %p43 = scmp.ne.s32.totalorder %s35, %s38
    %p44 = scmp.eq.s32.totalorder %s11, 0
    %p45 = por %p43, %p44
    %p46 = scmp.ne.s32.totalorder %s35, %s38
    %p47 = scmp.eq.s32.totalorder %s16, 3
    %p48 = por %p46, %p47
    %p49 = scmp.ne.s32.totalorder %s38, %s39
    %p50 = scmp.eq.s32.totalorder %s16, 0
    %p51 = por %p49, %p50
    %p52 = scmp.ne.s32.totalorder %s38, %s39
    %p53 = scmp.eq.s32.totalorder %s17, 3
    %p54 = por %p52, %p53
    %p56 = scmp.ne.s32.totalorder %s39, %s55
    %p57 = scmp.eq.s32.totalorder %s17, 0
    %p58 = por %p56, %p57
    %s59 = ssub.s32 %s18, %s30
    %p60 = scmp.eq.s32.totalorder %s59, 0
    %s62 = sadd.s32 %s61, 1
    %s63 = scalar_select %p60, %s61, %s62
    %p66 = pneg %p60
    %p67 = scmp.eq.s32.totalorder %s11, 3
    %p68 = por %p66, %p67
    %p69 = scmp.ne.s32.totalorder %s61, %s64
    %p70 = scmp.eq.s32.totalorder %s11, 0
    %p71 = por %p69, %p70
    %p72 = scmp.ne.s32.totalorder %s61, %s64
    %p73 = scmp.eq.s32.totalorder %s16, 3
    %p74 = por %p72, %p73
    %p75 = scmp.ne.s32.totalorder %s64, %s65
    %p76 = scmp.eq.s32.totalorder %s16, 0
    %p77 = por %p75, %p76
    %p78 = scmp.ne.s32.totalorder %s64, %s65
    %p79 = scmp.eq.s32.totalorder %s17, 3
    %p80 = por %p78, %p79
    %p82 = scmp.ne.s32.totalorder %s65, %s81
    %p83 = scmp.eq.s32.totalorder %s17, 0
    %p84 = por %p82, %p83
    %s85 = ssub.s32 %s18, %s30
    %s86 = ssub.s32 %s19, %s26
    %s87 = sor.u32 %s85, %s86
    %p88 = scmp.eq.s32.totalorder %s87, 0
    %s90 = sadd.s32 %s89, 1
    %s91 = scalar_select %p88, %s89, %s90
    %p94 = pneg %p88
    %p95 = scmp.eq.s32.totalorder %s11, 3
    %p96 = por %p94, %p95
    %p97 = scmp.ne.s32.totalorder %s89, %s92
    %p98 = scmp.eq.s32.totalorder %s11, 0
    %p99 = por %p97, %p98
    %p100 = scmp.ne.s32.totalorder %s89, %s92
    %p101 = scmp.eq.s32.totalorder %s16, 3
    %p102 = por %p100, %p101
    %p103 = scmp.ne.s32.totalorder %s92, %s93
    %p104 = scmp.eq.s32.totalorder %s16, 0
    %p105 = por %p103, %p104
    %p106 = scmp.ne.s32.totalorder %s92, %s93
    %p107 = scmp.eq.s32.totalorder %s17, 3
    %p108 = por %p106, %p107
    %p110 = scmp.ne.s32.totalorder %s93, %s109
    %p111 = scmp.eq.s32.totalorder %s17, 0
    %p112 = por %p110, %p111
    %s113 = ssub.s32 %s18, %s30
    %p114 = scmp.eq.s32.totalorder %s113, 0
    %s116 = sadd.s32 %s115, 1
    %s117 = scalar_select %p114, %s115, %s116
    %p120 = pneg %p114
    %p121 = scmp.eq.s32.totalorder %s11, 3
    %p122 = por %p120, %p121
    %p123 = scmp.ne.s32.totalorder %s115, %s118
    %p124 = scmp.eq.s32.totalorder %s11, 0
    %p125 = por %p123, %p124
    %p126 = scmp.ne.s32.totalorder %s115, %s118
    %p127 = scmp.eq.s32.totalorder %s16, 3
    %p128 = por %p126, %p127
    %p129 = scmp.ne.s32.totalorder %s118, %s119
    %p130 = scmp.eq.s32.totalorder %s16, 0
    %p131 = por %p129, %p130
    %p132 = scmp.ne.s32.totalorder %s118, %s119
    %p133 = scmp.eq.s32.totalorder %s17, 3
    %p134 = por %p132, %p133
    %p136 = scmp.ne.s32.totalorder %s119, %s135
    %p137 = scmp.eq.s32.totalorder %s17, 0
    %p138 = por %p136, %p137
    %s139 = ssub.s32 %s18, %s30
    %p140 = scmp.eq.s32.totalorder %s139, 0
    %s142 = sadd.s32 %s141, 1
    %s143 = scalar_select %p140, %s141, %s142
    %p146 = pneg %p140
    %p147 = scmp.eq.s32.totalorder %s11, 3
    %p148 = por %p146, %p147
    %p149 = scmp.ne.s32.totalorder %s141, %s144
    %p150 = scmp.eq.s32.totalorder %s11, 0
    %p151 = por %p149, %p150
    %p152 = scmp.ne.s32.totalorder %s141, %s144
    %p153 = scmp.eq.s32.totalorder %s16, 3
    %p154 = por %p152, %p153
    %p155 = scmp.ne.s32.totalorder %s144, %s145
    %p156 = scmp.eq.s32.totalorder %s16, 0
    %p157 = por %p155, %p156
    %p158 = scmp.ne.s32.totalorder %s144, %s145
    %p159 = scmp.eq.s32.totalorder %s17, 3
    %p160 = por %p158, %p159
    %p162 = scmp.ne.s32.totalorder %s145, %s161
    %p163 = scmp.eq.s32.totalorder %s17, 0
    %p164 = por %p162, %p163
    %p165 = scmp.le.s32.totalorder 1, %s11
    %p166 = scmp.lt.s32.totalorder %s11, 5
    %p167 = pnand %p165, %p166
    %p168 = pneg %p167
    // Predicated region
    $region9: #{dcgan_generator_forward.4} parent=5 // pred_check
      _
    $region10: #{dcgan_generator_forward.4} parent=5 // pred_check_branch
      %170 = sbr.rel (%p167) target = $region12
    $region11: #{dcgan_generator_forward.4} parent=5 // pred_region
      %s171 = ssub.s32 %s11, 1
    $region12: #{dcgan_generator_forward.4} parent=5 // pred_fallthru
      _
    %p172 = scmp.lt.s32.totalorder %s11, 4
    // Predicated region
    $region13: #{dcgan_generator_forward.4} parent=5 // pred_check
      %p173 = pneg %p172
    $region14: #{dcgan_generator_forward.4} parent=5 // pred_check_branch
      %175 = sbr.rel (%p173) target = $region16
    $region15: #{dcgan_generator_forward.4} parent=5 // pred_region
      // Predicated region
      $region17: #{dcgan_generator_forward.4} parent=15 // pred_check
        %p176 = pneg %p45
      $region18: #{dcgan_generator_forward.4} parent=15 // pred_check_branch
        %178 = sbr.rel (%p176) target = $region20
      $region19: #{dcgan_generator_forward.4} parent=15 // pred_region
        %s179 = smul.u32 4, %s19
        %p180 = scmp.lt.s32.totalorder %s18, 3
        %s181 = scalar_select %p180, %s18, 3
        %p182 = scmp.lt.s32.totalorder %s179, 3
        %s183 = scalar_select %p182, %s179, 3
        %s184 = smul.addr %s181, 4
        %s185 = sadd.s32 %s183, %s184
        %s186 = smul.addr %s185, 4
        %s187 = scalar_lea.vmem %s0, %s186
        %s188 = smul.u32 4, %s19
      $region20: #{dcgan_generator_forward.4} parent=15 // pred_fallthru
        _
      // Predicated region
      $region21: #{dcgan_generator_forward.4} parent=15 // pred_check
        %p189 = pneg %p71
      $region22: #{dcgan_generator_forward.4} parent=15 // pred_check_branch
        %191 = sbr.rel (%p189) target = $region24
      $region23: #{dcgan_generator_forward.4} parent=15 // pred_region
        %p192 = scmp.lt.s32.totalorder %s18, 3
        %s193 = scalar_select %p192, %s18, 3
        %s194 = smul.addr %s193, 16
        %s195 = smul.addr %s194, 4
        %s196 = scalar_lea.vmem %s1, %s195
      $region24: #{dcgan_generator_forward.4} parent=15 // pred_fallthru
        _
    $region16: #{dcgan_generator_forward.4} parent=5 // pred_fallthru
      _
    %p197 = scmp.le.s32.totalorder 1, %s11
    %p198 = scmp.lt.s32.totalorder %s11, 5
    %p199 = pnand %p197, %p198
    %p200 = pneg %p199
    // Predicated region
    $region25: #{dcgan_generator_forward.4} parent=5 // pred_check
      _
    $region26: #{dcgan_generator_forward.4} parent=5 // pred_check_branch
      %202 = sbr.rel (%p199) target = $region28
    $region27: #{dcgan_generator_forward.4} parent=5 // pred_region
      %s203 = ssub.s32 %s11, 1
      %s204 = smul.u32 4, %s21
      %p205 = scmp.lt.s32.totalorder %s20, 3
      %s206 = scalar_select %p205, %s20, 3
      %p207 = scmp.lt.s32.totalorder %s204, 3
      %s208 = scalar_select %p207, %s204, 3
      %s209 = smul.addr %s206, 4
      %s210 = sadd.s32 %s208, %s209
      %s211 = smul.addr %s210, 4
      %s212 = scalar_lea.vmem %s0, %s211
      %p213 = pneg %p51
      %p214 = pneg %p48
      %p215 = scmp.lt.s32.totalorder %s20, 3
      %s216 = scalar_select %p215, %s20, 3
      %s217 = smul.addr %s216, 16
      %s218 = smul.addr %s217, 4
      %s219 = scalar_lea.vmem %s1, %s218
      %p220 = pneg %p77
      %p221 = pneg %p74
      %p222 = pneg %p105
      %p223 = pneg %p102
      %s224 = smul.u32 4, %s21
      %p225 = scmp.lt.s32.totalorder %s20, 3
      %s226 = scalar_select %p225, %s20, 3
      %p227 = scmp.lt.s32.totalorder %s224, 3
      %s228 = scalar_select %p227, %s224, 3
      %s229 = smul.addr %s226, 4
      %s230 = sadd.s32 %s228, %s229
      %s231 = smul.addr %s230, 4
      %s232 = scalar_lea.vmem %s2, %s231
      %p233 = pneg %p131
      %p234 = pneg %p128
      %p235 = scmp.lt.s32.totalorder %s20, 3
      %s236 = scalar_select %p235, %s20, 3
      %s237 = scalar_lea.vmem %s3, %s236
      %p238 = pneg %p157
      %p239 = pneg %p154
      %p240 = scmp.lt.s32.totalorder %s20, 3
      %s241 = scalar_select %p240, %s20, 3
      %s242 = scalar_lea.vmem %s4, %s241
      %s243 = smul.u32 4, %s21
      %p244 = scmp.lt.s32.totalorder %s20, 3
      %s245 = scalar_select %p244, %s20, 3
      %p246 = scmp.lt.s32.totalorder %s243, 3
      %s247 = scalar_select %p246, %s243, 3
      %s248 = smul.addr %s245, 4
      %s249 = sadd.s32 %s247, %s248
      %s250 = smul.addr %s249, 4
      %s251 = scalar_lea.vmem %s0, %s250
      %s252 = smul.u32 4, %s21
      %p253 = scmp.lt.s32.totalorder %s20, 3
      %s254 = scalar_select %p253, %s20, 3
      %s255 = smul.addr %s254, 16
      %s256 = smul.addr %s255, 4
      %s257 = scalar_lea.vmem %s1, %s256
      %s258 = smul.u32 4, %s21
      %p259 = scmp.lt.s32.totalorder %s20, 3
      %s260 = scalar_select %p259, %s20, 3
      %p261 = scmp.lt.s32.totalorder %s258, 3
      %s262 = scalar_select %p261, %s258, 3
      %s263 = smul.addr %s260, 4
      %s264 = sadd.s32 %s262, %s263
      %s265 = smul.addr %s264, 4
      %s266 = scalar_lea.vmem %s2, %s265
      %s267 = smul.u32 4, %s21
      %p268 = scmp.lt.s32.totalorder %s20, 3
      %s269 = scalar_select %p268, %s20, 3
      %s270 = scalar_lea.vmem %s3, %s269
      %p271 = scmp.lt.s32.totalorder %s20, 3
      %s272 = scalar_select %p271, %s20, 3
      %s273 = scalar_lea.vmem %s4, %s272
      %v275 = vld [vmem:[%s251] sm:$0xf]
      %v276 = vld [vmem:[%s251 + $0x4] sm:$0xf]
      %v277 = vld [vmem:[%s251 + $0x8] sm:$0xf]
      %v278 = vld [vmem:[%s251 + $0xc] sm:$0xf]
      %v279 = vld [vmem:[%s257] sm:$0xf]
      %v280 = vld [vmem:[%s257 + $0x4] sm:$0xf]
      %v281 = vld [vmem:[%s257 + $0x8] sm:$0xf]
      %v282 = vld [vmem:[%s257 + $0xc] sm:$0xf]
      %v283 = vld [vmem:[%s257 + $0x10] sm:$0xf]
      %v284 = vld [vmem:[%s257 + $0x14] sm:$0xf]
      %v285 = vld [vmem:[%s257 + $0x18] sm:$0xf]
      %v286 = vld [vmem:[%s257 + $0x1c] sm:$0xf]
      %v287 = vld [vmem:[%s257 + $0x20] sm:$0xf]
      %v288 = vld [vmem:[%s257 + $0x24] sm:$0xf]
      %v289 = vld [vmem:[%s257 + $0x28] sm:$0xf]
      %v290 = vld [vmem:[%s257 + $0x2c] sm:$0xf]
      %v291 = vld [vmem:[%s257 + $0x30] sm:$0xf]
      %v292 = vld [vmem:[%s257 + $0x34] sm:$0xf]
      %v293 = vld [vmem:[%s257 + $0x38] sm:$0xf]
      %v294 = vld [vmem:[%s257 + $0x3c] sm:$0xf]
      %v299 = vunpack.c.l.b16 %v275
      %v300 = vunpack.c.l.b16 %v276
      %v301 = vunpack.c.l.b16 %v277
      %v302 = vunpack.c.l.b16 %v278
      %v303 = vpack.c.b16 %v300, %v299
      %v304 = vpack.c.b16 %v302, %v301
      %v323 = vunpack.c.l.b16 %v279
      %v324 = vunpack.c.l.b16 %v280
      %v325 = vunpack.c.l.b16 %v281
      %v326 = vunpack.c.l.b16 %v282
      %v327 = vunpack.c.l.b16 %v283
      %v328 = vunpack.c.l.b16 %v284
      %v329 = vunpack.c.l.b16 %v285
      %v330 = vunpack.c.l.b16 %v286
      %v331 = vunpack.c.l.b16 %v287
      %v332 = vunpack.c.l.b16 %v288
      %v333 = vunpack.c.l.b16 %v289
      %v334 = vunpack.c.l.b16 %v290
      %v335 = vunpack.c.l.b16 %v291
      %v336 = vunpack.c.l.b16 %v292
      %v337 = vunpack.c.l.b16 %v293
      %v338 = vunpack.c.l.b16 %v294
      %v339 = vpack.c.b16 %v324, %v323
      %v340 = vpack.c.b16 %v326, %v325
      %v341 = vpack.c.b16 %v328, %v327
      %v342 = vpack.c.b16 %v330, %v329
      %v343 = vpack.c.b16 %v332, %v331
      %v344 = vpack.c.b16 %v334, %v333
      %v345 = vpack.c.b16 %v336, %v335
      %v346 = vpack.c.b16 %v338, %v337
      %355 = vmatprep.subr.bf16.mxu0 0
      %356 = vmatpush1.bf16.msra.mxu0 %v339
      %357 = vmatprep.subr.bf16.mxu0 0
      %358 = vmatpush1.bf16.msra.mxu0 %v340
      %359 = vmatprep.subr.bf16.mxu0 0
      %360 = vmatpush1.bf16.msra.mxu0 %v341
      %361 = vmatprep.subr.bf16.mxu0 0
      %362 = vmatpush1.bf16.msra.mxu0 %v342
      %363 = vmatprep.subr.bf16.mxu0 0
      %364 = vmatpush1.bf16.msra.mxu0 %v343
      %365 = vmatprep.subr.bf16.mxu0 0
      %366 = vmatpush1.bf16.msra.mxu0 %v344
      %367 = vmatprep.subr.bf16.mxu0 0
      %368 = vmatpush1.bf16.msra.mxu0 %v345
      %369 = vmatprep.subr.bf16.mxu0 0
      %370 = vmatpush1.bf16.msra.mxu0 %v346
      %371 = vmatprep.subr.bf16.mxu0 0
      %372 = vmatpush1.bf16.msra.mxu0 0
      %373 = vmatprep.subr.bf16.mxu0 0
      %374 = vmatpush1.bf16.msra.mxu0 0
      %375 = vmatprep.subr.bf16.mxu0 0
      %376 = vmatpush1.bf16.msra.mxu0 0
      %377 = vmatprep.subr.bf16.mxu0 0
      %378 = vmatpush1.bf16.msra.mxu0 0
      %379 = vmatprep.subr.bf16.mxu0 0
      %380 = vmatpush1.bf16.msra.mxu0 0
      %381 = vmatprep.subr.bf16.mxu0 0
      %382 = vmatpush1.bf16.msra.mxu0 0
      %383 = vmatprep.subr.bf16.mxu0 0
      %384 = vmatpush1.bf16.msra.mxu0 0
      %385 = vmatprep.subr.bf16.mxu0 0
      %386 = vmatpush1.bf16.msra.mxu0 0
      %387 = vmatprep.mubr.bf16.mxu0 0
      %388 = vmatmul.mubr.bf16.gmra.mrb[0].mxu0 %v303
      %v389 = vpop.f32.mrb[0].mxu0
      %v390 = vadd.f32 0.0, %v389
      %v391 = vpop.f32.mrb[0].mxu0
      %v392 = vpop.f32.mrb[0].mxu0
      %v393 = vadd.f32 0.0, %v392
      %v394 = vpop.f32.mrb[0].mxu0
      %395 = vmatprep.mubr.bf16.mxu0 0
      %396 = vmatmul.mubr.bf16.gmra.mrb[0].mxu0 %v304
      %v397 = vpop.f32.mrb[0].mxu0
      %v398 = vadd.f32 0.0, %v397
      %v399 = vpop.f32.mrb[0].mxu0
      %v400 = vpop.f32.mrb[0].mxu0
      %v401 = vadd.f32 0.0, %v400
      %v402 = vpop.f32.mrb[0].mxu0
      %403 = vdwg.mxu0
      %v404 = vpack.c.bf16 %v393, %v390
      %v405 = vpack.c.bf16 %v401, %v398
      %v408 = vunpack.c.l.b16 %v404
      %v409 = vunpack.c.h.b16 %v404
      %v410 = vunpack.c.l.b16 %v405
      %v411 = vunpack.c.h.b16 %v405
      %v412 = vpack.c.b16 %v408, %v408
      %v413 = vpack.c.b16 %v409, %v409
      %v414 = vpack.c.b16 %v410, %v410
      %v415 = vpack.c.b16 %v411, %v411
      %420 = vst [vmem:[%s266] sm:$0xf] %v412
      %421 = vst [vmem:[%s266 + $0x4] sm:$0xf] %v413
      %422 = vst [vmem:[%s266 + $0x8] sm:$0xf] %v414
      %423 = vst [vmem:[%s266 + $0xc] sm:$0xf] %v415
      %v424 = vadd.f32 %v390, %v393
      %v425 = vadd.f32 %v424, %v398
      %v426 = vadd.f32 %v425, %v401
      %v427 = vrot.slane %v426, 4
      %v428 = vadd.f32 %v426, %v427
      %v429 = vrot.slane %v428, 2
      %v430 = vadd.f32 %v428, %v429
      %v431 = vrot.slane %v430, 1
      %v432 = vadd.f32 %v430, %v431
      %v433 = vmul.f32 %v390, %v390
      %v434 = vmul.f32 %v393, %v393
      %v435 = vmul.f32 %v398, %v398
      %v436 = vmul.f32 %v401, %v401
      %v437 = vadd.f32 %v433, %v434
      %v438 = vadd.f32 %v437, %v435
      %v439 = vadd.f32 %v438, %v436
      %v440 = vrot.slane %v439, 4
      %v441 = vadd.f32 %v439, %v440
      %v442 = vrot.slane %v441, 2
      %v443 = vadd.f32 %v441, %v442
      %v444 = vrot.slane %v443, 1
      %v445 = vadd.f32 %v443, %v444
      %p446 = scmp.eq.s32.totalorder %s21, 0
      // Predicated region
      $region29: #{dcgan_generator_forward.4} parent=27 // pred_check
        %p447 = pneg %p446
      $region30: #{dcgan_generator_forward.4} parent=27 // pred_check_branch
        %449 = sbr.rel (%p447) target = $region32
      $region31: #{dcgan_generator_forward.4} parent=27 // pred_region
        %450 = vst [vmem:[%s270] sm:$0x1] %v432
        %451 = vst [vmem:[%s273] sm:$0x1] %v445
      $region32: #{dcgan_generator_forward.4} parent=27 // pred_fallthru
        _
      %p452 = scmp.ne.s32.totalorder %s21, 0
      // Predicated region
      $region33: #{dcgan_generator_forward.4} parent=27 // pred_check
        %p453 = pneg %p452
      $region34: #{dcgan_generator_forward.4} parent=27 // pred_check_branch
        %455 = sbr.rel (%p453) target = $region36
      $region35: #{dcgan_generator_forward.4} parent=27 // pred_region
        %v456 = vld [vmem:[%s270] sm:$0x1]
        %v457 = vadd.f32 %v456, %v432
        %458 = vst [vmem:[%s270] sm:$0x1] %v457
        %v459 = vld [vmem:[%s273] sm:$0x1]
        %v460 = vadd.f32 %v459, %v445
        %461 = vst [vmem:[%s273] sm:$0x1] %v460
      $region36: #{dcgan_generator_forward.4} parent=27 // pred_fallthru
        _
      %s462 = smul.u32 4, %s21
      %p463 = scmp.lt.s32.totalorder %s20, 3
      %s464 = scalar_select %p463, %s20, 3
      %p465 = scmp.lt.s32.totalorder %s462, 3
      %s466 = scalar_select %p465, %s462, 3
      %s467 = smul.addr %s464, 4
      %s468 = sadd.s32 %s466, %s467
      %s469 = smul.addr %s468, 4
      %s470 = scalar_lea.vmem %s2, %s469
      %p471 = scmp.lt.s32.totalorder %s20, 3
      %s472 = scalar_select %p471, %s20, 3
      %s473 = scalar_lea.vmem %s3, %s472
      %p474 = scmp.lt.s32.totalorder %s20, 3
      %s475 = scalar_select %p474, %s20, 3
      %s476 = scalar_lea.vmem %s4, %s475
      // Predicated region
      $region37: #{dcgan_generator_forward.4} parent=27 // pred_check
        %p477 = pneg %p102
      $region38: #{dcgan_generator_forward.4} parent=27 // pred_check_branch
        %479 = sbr.rel (%p477) target = $region40
      $region39: #{dcgan_generator_forward.4} parent=27 // pred_region
        %s480 = smul.u32 4, %s21
      $region40: #{dcgan_generator_forward.4} parent=27 // pred_fallthru
        _
      // Predicated region
      $region41: #{dcgan_generator_forward.4} parent=27 // pred_check
        %p481 = pneg %p128
      $region42: #{dcgan_generator_forward.4} parent=27 // pred_check_branch
        %483 = sbr.rel (%p481) target = $region44
      $region43: #{dcgan_generator_forward.4} parent=27 // pred_region
        _
      $region44: #{dcgan_generator_forward.4} parent=27 // pred_fallthru
        _
      // Predicated region
      $region45: #{dcgan_generator_forward.4} parent=27 // pred_check
        %p484 = pneg %p154
      $region46: #{dcgan_generator_forward.4} parent=27 // pred_check_branch
        %486 = sbr.rel (%p484) target = $region48
      $region47: #{dcgan_generator_forward.4} parent=27 // pred_region
        _
      $region48: #{dcgan_generator_forward.4} parent=27 // pred_fallthru
        _
    $region28: #{dcgan_generator_forward.4} parent=5 // pred_fallthru
      _
    %p487 = scmp.le.s32.totalorder 2, %s11
    // Predicated region
    $region49: #{dcgan_generator_forward.4} parent=5 // pred_check
      %p488 = pneg %p487
    $region50: #{dcgan_generator_forward.4} parent=5 // pred_check_branch
      %490 = sbr.rel (%p488) target = $region52
    $region51: #{dcgan_generator_forward.4} parent=5 // pred_region
      %s491 = ssub.s32 %s11, 2
      // Predicated region
      $region53: #{dcgan_generator_forward.4} parent=51 // pred_check
        %p492 = pneg %p108
      $region54: #{dcgan_generator_forward.4} parent=51 // pred_check_branch
        %494 = sbr.rel (%p492) target = $region56
      $region55: #{dcgan_generator_forward.4} parent=51 // pred_region
        %s495 = smul.u32 4, %s23
        %p496 = scmp.lt.s32.totalorder %s22, 3
        %s497 = scalar_select %p496, %s22, 3
        %p498 = scmp.lt.s32.totalorder %s495, 3
        %s499 = scalar_select %p498, %s495, 3
        %s500 = smul.addr %s497, 4
        %s501 = sadd.s32 %s499, %s500
        %s502 = smul.addr %s501, 4
        %s503 = scalar_lea.vmem %s2, %s502
      $region56: #{dcgan_generator_forward.4} parent=51 // pred_fallthru
        _
      // Predicated region
      $region57: #{dcgan_generator_forward.4} parent=51 // pred_check
        %p504 = pneg %p134
      $region58: #{dcgan_generator_forward.4} parent=51 // pred_check_branch
        %506 = sbr.rel (%p504) target = $region60
      $region59: #{dcgan_generator_forward.4} parent=51 // pred_region
        %p507 = scmp.lt.s32.totalorder %s22, 3
        %s508 = scalar_select %p507, %s22, 3
        %s509 = scalar_lea.vmem %s3, %s508
      $region60: #{dcgan_generator_forward.4} parent=51 // pred_fallthru
        _
      // Predicated region
      $region61: #{dcgan_generator_forward.4} parent=51 // pred_check
        %p510 = pneg %p160
      $region62: #{dcgan_generator_forward.4} parent=51 // pred_check_branch
        %512 = sbr.rel (%p510) target = $region64
      $region63: #{dcgan_generator_forward.4} parent=51 // pred_region
        %p513 = scmp.lt.s32.totalorder %s22, 3
        %s514 = scalar_select %p513, %s22, 3
        %s515 = scalar_lea.vmem %s4, %s514
      $region64: #{dcgan_generator_forward.4} parent=51 // pred_fallthru
        _
    $region52: #{dcgan_generator_forward.4} parent=5 // pred_fallthru
      _
  $region6: #{dcgan_generator_forward.4} parent=0 // loop_footer
    %s15 = sadd.s32 1, %s11
  $region7: #{dcgan_generator_forward.4} parent=0 // loop_footer_branch
    %10 = sbr.rel target = $region3
  $region8: #{dcgan_generator_forward.4} parent=0 // loop_exit
    _

// kernel: dcgan_generator_forward.5
$region0: #{dcgan_generator_forward.5}
  #allocation0 [shape = 'u32[]', space=smem, size = 0x4, offset = 0x4, fixed_abs, tag = 'smem constant byte address 0x4 - core index']
  #allocation1 [shape = 'u32[144,128]{1,0:T(1,128)}', space=vmem, size = 0x12000, scoped, tag = 'internal scratch']
  %s0 = inlined_call_operand.vmem [shape: bf16[4,8,64], index: 0, kind: input, shape index: {}]
  %s1 = inlined_call_operand.vmem [shape: bf16[4,64,128], index: 1, kind: input, shape index: {}]
  %s2 = inlined_call_operand.vmem [shape: f32[8,1], index: 2, kind: input, shape index: {}]
  %s3 = inlined_call_operand.vmem [shape: f32[4,8,128], index: 3, kind: output, shape index: {}]
  %s4 = sld [smem:[#allocation0]]
  $region45: #{dcgan_generator_forward.5} parent=0
    _
  %s6 = ssub.s32 1, %s4
  %s7 = scalar_select 0, %s6, %s4
  loop: start=0, step=1, limit=6
  $region2: #{dcgan_generator_forward.5} parent=0 // loop_pre_header
    _
  $region3: #{dcgan_generator_forward.5} parent=0 // loop_header
    %s9 = sphi 0, %s13
    %p10 = scmp.ge.s32.totalorder %s9, 6
    %s16 = sphi 0, %s28
    %s17 = sphi 0, %s24
    %s18 = sphi 0, %s16
    %s19 = sphi 0, %s17
    %s20 = sphi 0, %s18
    %s21 = sphi 0, %s19
    %s31 = sphi 0, %s33
    %s34 = sphi 0, %s31
    %s35 = sphi 0, %s34
    %s51 = sphi 0, %s35
    %s59 = sphi 0, %s61
    %s62 = sphi 0, %s59
    %s63 = sphi 0, %s62
    %s79 = sphi 0, %s63
    %s83 = sphi 0, %s83
    %s85 = sphi 0, %s83
    %s86 = sphi 0, %s85
    %s100 = sphi 0, %s86
    %s108 = sphi 0, %s110
    %s111 = sphi 0, %s108
    %s112 = sphi 0, %s111
    %s128 = sphi 0, %s112
  $region4: #{dcgan_generator_forward.5} parent=0 // loop_header_branch
    %12 = sbr.rel (%p10) target = $region8
  $region5: #{dcgan_generator_forward.5} parent=0 // loop_body
    %s14 = ssub.s32 %s9, 1
    %s15 = ssub.s32 %s9, 2
    %s22 = sadd.s32 1, %s17
    %p23 = scmp.ge.s32.totalorder %s22, 1
    %s24 = scalar_select %p23, 0, %s22
    %s25 = sadd.s32 1, %s16
    %s26 = scalar_select %p23, %s25, %s16
    %p27 = scmp.ge.s32.totalorder %s26, 4
    %s28 = scalar_select %p27, 0, %s26
    %s29 = ssub.s32 %s16, %s28
    %p30 = scmp.eq.s32.totalorder %s29, 0
    %s32 = sadd.s32 %s31, 1
    %s33 = scalar_select %p30, %s31, %s32
    %p36 = pneg %p30
    %p37 = scmp.eq.s32.totalorder %s9, 3
    %p38 = por %p36, %p37
    %p39 = scmp.ne.s32.totalorder %s31, %s34
    %p40 = scmp.eq.s32.totalorder %s9, 0
    %p41 = por %p39, %p40
    %p42 = scmp.ne.s32.totalorder %s31, %s34
    %p43 = scmp.eq.s32.totalorder %s14, 3
    %p44 = por %p42, %p43
    %p45 = scmp.ne.s32.totalorder %s34, %s35
    %p46 = scmp.eq.s32.totalorder %s14, 0
    %p47 = por %p45, %p46
    %p48 = scmp.ne.s32.totalorder %s34, %s35
    %p49 = scmp.eq.s32.totalorder %s15, 3
    %p50 = por %p48, %p49
    %p52 = scmp.ne.s32.totalorder %s35, %s51
    %p53 = scmp.eq.s32.totalorder %s15, 0
    %p54 = por %p52, %p53
    %s55 = ssub.s32 %s16, %s28
    %s56 = ssub.s32 %s17, %s24
    %s57 = sor.u32 %s55, %s56
    %p58 = scmp.eq.s32.totalorder %s57, 0
    %s60 = sadd.s32 %s59, 1
    %s61 = scalar_select %p58, %s59, %s60
    %p64 = pneg %p58
    %p65 = scmp.eq.s32.totalorder %s9, 3
    %p66 = por %p64, %p65
    %p67 = scmp.ne.s32.totalorder %s59, %s62
    %p68 = scmp.eq.s32.totalorder %s9, 0
    %p69 = por %p67, %p68
    %p70 = scmp.ne.s32.totalorder %s59, %s62
    %p71 = scmp.eq.s32.totalorder %s14, 3
    %p72 = por %p70, %p71
    %p73 = scmp.ne.s32.totalorder %s62, %s63
    %p74 = scmp.eq.s32.totalorder %s14, 0
    %p75 = por %p73, %p74
    %p76 = scmp.ne.s32.totalorder %s62, %s63
    %p77 = scmp.eq.s32.totalorder %s15, 3
    %p78 = por %p76, %p77
    %p80 = scmp.ne.s32.totalorder %s63, %s79
    %p81 = scmp.eq.s32.totalorder %s15, 0
    %p82 = por %p80, %p81
    %s84 = sadd.s32 %s83, 1
    %p87 = scmp.eq.s32.totalorder %s9, 3
    %p88 = scmp.ne.s32.totalorder %s83, %s85
    %p89 = scmp.eq.s32.totalorder %s9, 0
    %p90 = por %p88, %p89
    %p91 = scmp.ne.s32.totalorder %s83, %s85
    %p92 = scmp.eq.s32.totalorder %s14, 3
    %p93 = por %p91, %p92
    %p94 = scmp.ne.s32.totalorder %s85, %s86
    %p95 = scmp.eq.s32.totalorder %s14, 0
    %p96 = por %p94, %p95
    %p97 = scmp.ne.s32.totalorder %s85, %s86
    %p98 = scmp.eq.s32.totalorder %s15, 3
    %p99 = por %p97, %p98
    %p101 = scmp.ne.s32.totalorder %s86, %s100
    %p102 = scmp.eq.s32.totalorder %s15, 0
    %p103 = por %p101, %p102
    %s104 = ssub.s32 %s16, %s28
    %s105 = ssub.s32 %s17, %s24
    %s106 = sor.u32 %s104, %s105
    %p107 = scmp.eq.s32.totalorder %s106, 0
    %s109 = sadd.s32 %s108, 1
    %s110 = scalar_select %p107, %s108, %s109
    %p113 = pneg %p107
    %p114 = scmp.eq.s32.totalorder %s9, 3
    %p115 = por %p113, %p114
    %p116 = scmp.ne.s32.totalorder %s108, %s111
    %p117 = scmp.eq.s32.totalorder %s9, 0
    %p118 = por %p116, %p117
    %p119 = scmp.ne.s32.totalorder %s108, %s111
    %p120 = scmp.eq.s32.totalorder %s14, 3
    %p121 = por %p119, %p120
    %p122 = scmp.ne.s32.totalorder %s111, %s112
    %p123 = scmp.eq.s32.totalorder %s14, 0
    %p124 = por %p122, %p123
    %p125 = scmp.ne.s32.totalorder %s111, %s112
    %p126 = scmp.eq.s32.totalorder %s15, 3
    %p127 = por %p125, %p126
    %p129 = scmp.ne.s32.totalorder %s112, %s128
    %p130 = scmp.eq.s32.totalorder %s15, 0
    %p131 = por %p129, %p130
    %p132 = scmp.le.s32.totalorder 1, %s9
    %p133 = scmp.lt.s32.totalorder %s9, 5
    %p134 = pnand %p132, %p133
    %p135 = pneg %p134
    // Predicated region
    $region9: #{dcgan_generator_forward.5} parent=5 // pred_check
      _
    $region10: #{dcgan_generator_forward.5} parent=5 // pred_check_branch
      %137 = sbr.rel (%p134) target = $region12
    $region11: #{dcgan_generator_forward.5} parent=5 // pred_region
      %s138 = ssub.s32 %s9, 1
      // Predicated region
      $region13: #{dcgan_generator_forward.5} parent=11 // pred_check
        %p139 = pneg %p96
      $region14: #{dcgan_generator_forward.5} parent=11 // pred_check_branch
        %141 = sbr.rel (%p139) target = $region16
      $region15: #{dcgan_generator_forward.5} parent=11 // pred_region
        _
      $region16: #{dcgan_generator_forward.5} parent=11 // pred_fallthru
        _
    $region12: #{dcgan_generator_forward.5} parent=5 // pred_fallthru
      _
    %p142 = scmp.lt.s32.totalorder %s9, 4
    // Predicated region
    $region17: #{dcgan_generator_forward.5} parent=5 // pred_check
      %p143 = pneg %p142
    $region18: #{dcgan_generator_forward.5} parent=5 // pred_check_branch
      %145 = sbr.rel (%p143) target = $region20
    $region19: #{dcgan_generator_forward.5} parent=5 // pred_region
      // Predicated region
      $region21: #{dcgan_generator_forward.5} parent=19 // pred_check
        %p146 = pneg %p41
      $region22: #{dcgan_generator_forward.5} parent=19 // pred_check_branch
        %148 = sbr.rel (%p146) target = $region24
      $region23: #{dcgan_generator_forward.5} parent=19 // pred_region
        %p149 = scmp.lt.s32.totalorder %s16, 3
        %s150 = scalar_select %p149, %s16, 3
        %s151 = smul.addr %s150, 4
        %s152 = scalar_lea.vmem %s0, %s151
      $region24: #{dcgan_generator_forward.5} parent=19 // pred_fallthru
        _
      // Predicated region
      $region25: #{dcgan_generator_forward.5} parent=19 // pred_check
        %p153 = pneg %p69
      $region26: #{dcgan_generator_forward.5} parent=19 // pred_check_branch
        %155 = sbr.rel (%p153) target = $region28
      $region27: #{dcgan_generator_forward.5} parent=19 // pred_region
        %p156 = scmp.lt.s32.totalorder %s16, 3
        %s157 = scalar_select %p156, %s16, 3
        %p158 = scmp.lt.s32.totalorder %s17, 0
        %s159 = scalar_select %p158, %s17, 0
        %s160 = smul.addr %s157, 8
        %s161 = sadd.s32 %s159, %s160
        %s162 = smul.addr %s161, 4
        %s163 = scalar_lea.vmem %s1, %s162
      $region28: #{dcgan_generator_forward.5} parent=19 // pred_fallthru
        _
    $region20: #{dcgan_generator_forward.5} parent=5 // pred_fallthru
      _
    %p164 = scmp.le.s32.totalorder 1, %s9
    %p165 = scmp.lt.s32.totalorder %s9, 5
    %p166 = pnand %p164, %p165
    %p167 = pneg %p166
    // Predicated region
    $region29: #{dcgan_generator_forward.5} parent=5 // pred_check
      _
    $region30: #{dcgan_generator_forward.5} parent=5 // pred_check_branch
      %169 = sbr.rel (%p166) target = $region32
    $region31: #{dcgan_generator_forward.5} parent=5 // pred_region
      %s170 = ssub.s32 %s9, 1
      %p171 = scmp.lt.s32.totalorder %s18, 3
      %s172 = scalar_select %p171, %s18, 3
      %s173 = smul.addr %s172, 4
      %s174 = scalar_lea.vmem %s0, %s173
      %p175 = pneg %p47
      %p176 = pneg %p44
      %p177 = scmp.lt.s32.totalorder %s18, 3
      %s178 = scalar_select %p177, %s18, 3
      %p179 = scmp.lt.s32.totalorder %s19, 0
      %s180 = scalar_select %p179, %s19, 0
      %s181 = smul.addr %s178, 8
      %s182 = sadd.s32 %s180, %s181
      %s183 = smul.addr %s182, 4
      %s184 = scalar_lea.vmem %s1, %s183
      %p185 = pneg %p75
      %p186 = pneg %p72
      %p187 = pneg %p96
      %p188 = pneg %p93
      %p189 = pneg %p124
      %p190 = pneg %p121
      %p191 = scmp.lt.s32.totalorder %s18, 3
      %s192 = scalar_select %p191, %s18, 3
      %p193 = scmp.lt.s32.totalorder %s19, 0
      %s194 = scalar_select %p193, %s19, 0
      %s195 = sadd.s32 %s194, %s192
      %s196 = smul.addr %s195, 8
      %s197 = scalar_lea.vmem %s3, %s196
      %p198 = scmp.lt.s32.totalorder %s18, 3
      %s199 = scalar_select %p198, %s18, 3
      %s200 = smul.addr %s199, 4
      %s201 = scalar_lea.vmem %s0, %s200
      %p202 = scmp.lt.s32.totalorder %s18, 3
      %s203 = scalar_select %p202, %s18, 3
      %p204 = scmp.lt.s32.totalorder %s19, 0
      %s205 = scalar_select %p204, %s19, 0
      %s206 = smul.addr %s203, 8
      %s207 = sadd.s32 %s205, %s206
      %s208 = smul.addr %s207, 4
      %s209 = scalar_lea.vmem %s1, %s208
      %p210 = scmp.lt.s32.totalorder %s18, 3
      %s211 = scalar_select %p210, %s18, 3
      %p212 = scmp.lt.s32.totalorder %s19, 0
      %s213 = scalar_select %p212, %s19, 0
      %s214 = sadd.s32 %s213, %s211
      %s215 = smul.addr %s214, 8
      %s216 = scalar_lea.vmem %s3, %s215
      %v218 = vld [vmem:[%s201] sm:$0xf]
      %v219 = vld [vmem:[%s209] sm:$0xf]
      %v220 = vld [vmem:[%s209 + $0x4] sm:$0xf]
      %v221 = vld [vmem:[%s209 + $0x8] sm:$0xf]
      %v222 = vld [vmem:[%s209 + $0xc] sm:$0xf]
      %v223 = vld [vmem:[%s209 + $0x10] sm:$0xf]
      %v224 = vld [vmem:[%s209 + $0x14] sm:$0xf]
      %v225 = vld [vmem:[%s209 + $0x18] sm:$0xf]
      %v226 = vld [vmem:[%s209 + $0x1c] sm:$0xf]
      %v227 = vld [vmem:[%s2] sm:$0xff]
      %229 = vset.pattern.permute.xlu0 0
      %230 = vperm.xlu0 %229, %v227
      %v231 = vpop.permute.xlu0 %230
      %v241 = vunpack.c.l.b16 %v219
      %v242 = vunpack.c.l.b16 %v220
      %v243 = vunpack.c.l.b16 %v221
      %v244 = vunpack.c.l.b16 %v222
      %v245 = vunpack.c.l.b16 %v223
      %v246 = vunpack.c.l.b16 %v224
      %v247 = vunpack.c.l.b16 %v225
      %v248 = vunpack.c.l.b16 %v226
      %v249 = vpack.c.b16 %v242, %v241
      %v250 = vpack.c.b16 %v244, %v243
      %v251 = vpack.c.b16 %v246, %v245
      %v252 = vpack.c.b16 %v248, %v247
      %vm257 = vcmask 523264
      %v259 = vsel %vm257, %v218, 0
      %261 = vmatprep.subr.bf16.mxu0 0
      %262 = vmatpush1.bf16.msra.mxu0 %v249
      %263 = vmatprep.subr.bf16.mxu0 0
      %264 = vmatpush1.bf16.msra.mxu0 %v250
      %265 = vmatprep.subr.bf16.mxu0 0
      %266 = vmatpush1.bf16.msra.mxu0 %v251
      %267 = vmatprep.subr.bf16.mxu0 0
      %268 = vmatpush1.bf16.msra.mxu0 %v252
      %269 = vmatprep.subr.bf16.mxu0 0
      %270 = vmatpush1.bf16.msra.mxu0 0
      %271 = vmatprep.subr.bf16.mxu0 0
      %272 = vmatpush1.bf16.msra.mxu0 0
      %273 = vmatprep.subr.bf16.mxu0 0
      %274 = vmatpush1.bf16.msra.mxu0 0
      %275 = vmatprep.subr.bf16.mxu0 0
      %276 = vmatpush1.bf16.msra.mxu0 0
      %277 = vmatprep.subr.bf16.mxu0 0
      %278 = vmatpush1.bf16.msra.mxu0 0
      %279 = vmatprep.subr.bf16.mxu0 0
      %280 = vmatpush1.bf16.msra.mxu0 0
      %281 = vmatprep.subr.bf16.mxu0 0
      %282 = vmatpush1.bf16.msra.mxu0 0
      %283 = vmatprep.subr.bf16.mxu0 0
      %284 = vmatpush1.bf16.msra.mxu0 0
      %285 = vmatprep.subr.bf16.mxu0 0
      %286 = vmatpush1.bf16.msra.mxu0 0
      %287 = vmatprep.subr.bf16.mxu0 0
      %288 = vmatpush1.bf16.msra.mxu0 0
      %289 = vmatprep.subr.bf16.mxu0 0
      %290 = vmatpush1.bf16.msra.mxu0 0
      %291 = vmatprep.subr.bf16.mxu0 0
      %292 = vmatpush1.bf16.msra.mxu0 0
      %293 = vmatprep.mubr.bf16.mxu0 0
      %294 = vmatmul.mubr.bf16.gmra.mrb[0].mxu0 %v259
      %v295 = vpop.f32.mrb[0].mxu0
      %v296 = vadd.f32 %v231, %v295
      %v297 = vpop.f32.mrb[0].mxu0
      %v298 = vpop.f32.mrb[0].mxu0
      %v299 = vpop.f32.mrb[0].mxu0
      %300 = vdwg.mxu0
      %v301 = vtanh.pop %v296
      %302 = vst [vmem:[%s216] sm:$0xff] %v301
      %p303 = scmp.lt.s32.totalorder %s18, 3
      %s304 = scalar_select %p303, %s18, 3
      %p305 = scmp.lt.s32.totalorder %s19, 0
      %s306 = scalar_select %p305, %s19, 0
      %s307 = sadd.s32 %s306, %s304
      %s308 = smul.addr %s307, 8
      %s309 = scalar_lea.vmem %s3, %s308
      // Predicated region
      $region33: #{dcgan_generator_forward.5} parent=31 // pred_check
        %p310 = pneg %p121
      $region34: #{dcgan_generator_forward.5} parent=31 // pred_check_branch
        %312 = sbr.rel (%p310) target = $region36
      $region35: #{dcgan_generator_forward.5} parent=31 // pred_region
        _
      $region36: #{dcgan_generator_forward.5} parent=31 // pred_fallthru
        _
    $region32: #{dcgan_generator_forward.5} parent=5 // pred_fallthru
      _
    %p313 = scmp.le.s32.totalorder 2, %s9
    // Predicated region
    $region37: #{dcgan_generator_forward.5} parent=5 // pred_check
      %p314 = pneg %p313
    $region38: #{dcgan_generator_forward.5} parent=5 // pred_check_branch
      %316 = sbr.rel (%p314) target = $region40
    $region39: #{dcgan_generator_forward.5} parent=5 // pred_region
      %s317 = ssub.s32 %s9, 2
      // Predicated region
      $region41: #{dcgan_generator_forward.5} parent=39 // pred_check
        %p318 = pneg %p127
      $region42: #{dcgan_generator_forward.5} parent=39 // pred_check_branch
        %320 = sbr.rel (%p318) target = $region44
      $region43: #{dcgan_generator_forward.5} parent=39 // pred_region
        %p321 = scmp.lt.s32.totalorder %s20, 3
        %s322 = scalar_select %p321, %s20, 3
        %p323 = scmp.lt.s32.totalorder %s21, 0
        %s324 = scalar_select %p323, %s21, 0
        %s325 = sadd.s32 %s324, %s322
        %s326 = smul.addr %s325, 8
        %s327 = scalar_lea.vmem %s3, %s326
      $region44: #{dcgan_generator_forward.5} parent=39 // pred_fallthru
        _
    $region40: #{dcgan_generator_forward.5} parent=5 // pred_fallthru
      _
  $region6: #{dcgan_generator_forward.5} parent=0 // loop_footer
    %s13 = sadd.s32 1, %s9
  $region7: #{dcgan_generator_forward.5} parent=0 // loop_footer_branch
    %8 = sbr.rel target = $region3
  $region8: #{dcgan_generator_forward.5} parent=0 // loop_exit
    _

</llo_original>
